<compile_context>
chip_gen: v7x
topology: tpu7x:2x2x1
jax: 0.10.0
libtpu: 0.0.40
codegen_flags: <defaults>
</compile_context>

<pallas_src>
import functools

import jax
import jax.numpy as jnp
from jax import lax
from jax.experimental import pallas as pl
from jax.experimental.pallas import tpu as pltpu

EPS = 1e-5      # nn.BatchNorm2d default eps
LANES = 128     # TPU lane width; channels are zero-padded to a multiple of this


def conv3x3_k9_kernel(x_ref, w_ref, scale_ref, bias_ref, y_ref, stats_ref,
                      *, bn_relu_input: bool, valid_w: int):
    """3x3 / stride-1 / pad-1 conv over one batch tile, as ONE K-packed MXU matmul.

      x_ref     : (TB, H, Wa, Cp)  input tile (compute dtype); Wa is W rounded up to 8
      w_ref     : (9*Cp, Cp)       K-packed weights, row order = (kh, kw, cin)
      scale/bias: (1, Cp) f32      folded BN of the input (used iff bn_relu_input)
      y_ref     : (TB, H, Wa, Cp)  conv output tile (compute dtype)
      stats_ref : (1, 2, Cp) f32   [tile sum, tile centered sum-of-squares]

    Boundary handling: two whole-tile sublane shifts with a zero column give the
    (w-1)/(w+1) neighbor values; the H halo is aligned major-axis slicing with zero
    rows.  Alignment-pad columns (w >= valid_w) are masked out of the statistics and,
    for the BN+ReLU input path, re-zeroed so they remain a true zero halo.
    """
    TB, H, Wa, Cp = x_ref.shape
    mm_dtype = w_ref.dtype
    rows = TB * H * Wa

    wmask = None
    if valid_w < Wa:   # only compiled when the stored width carries alignment padding
        wmask = lax.broadcasted_iota(jnp.int32, (TB, H, Wa, Cp), 2) < valid_w

    if bn_relu_input:
        xf = x_ref[...].astype(jnp.float32)
        xf = jnp.maximum(scale_ref[...] * xf + bias_ref[...], 0.0)   # folded BN + ReLU
        if wmask is not None:
            xf = jnp.where(wmask, xf, 0.0)
        xc = xf.astype(mm_dtype)                 # single cast to the MXU operand dtype
    else:
        xc = x_ref[...]                          # already MXU dtype, zero-padded input

    zrow = jnp.zeros((TB, 1, Wa, Cp), mm_dtype)
    zcol = jnp.zeros((TB, H, 1, Cp), mm_dtype)
    # Neighbor values along W with a zero boundary: two sublane shifts per tile total.
    shifted = (
        jnp.concatenate([zcol, xc[:, :, :Wa - 1, :]], axis=2),   # value at (w-1)
        xc,                                                       # value at (w)
        jnp.concatenate([xc[:, :, 1:, :], zcol], axis=2),         # value at (w+1)
    )

    def tap(kh, kw):
        s = shifted[kw]
        if kh == 0:
            return jnp.concatenate([zrow, s[:, :H - 1]], axis=1)  # value at (h-1)
        if kh == 1:
            return s                                              # value at (h)
        return jnp.concatenate([s[:, 1:], zrow], axis=1)          # value at (h+1)

    # In-register im2col: lane-aligned concat of the 9 taps -> one K = 9*Cp matmul.
    patches = jnp.concatenate(
        [tap(kh, kw) for kh in range(3) for kw in range(3)], axis=-1)
    acc = jnp.dot(patches.reshape(rows, 9 * Cp), w_ref[...],
                  preferred_element_type=jnp.float32)             # (rows, Cp) f32

    # Per-tile centered BN partial statistics (exact Chan combination in the wrapper).
    tile_count = TB * H * valid_w
    if wmask is not None:
        rmask = wmask.reshape(rows, Cp)
        macc = jnp.where(rmask, acc, 0.0)
    else:
        rmask = None
        macc = acc
    tsum = jnp.sum(macc, axis=0, keepdims=True)                   # (1, Cp)
    tmean = tsum * (1.0 / tile_count)
    d = macc - tmean
    if rmask is not None:
        d = jnp.where(rmask, d, 0.0)
    stats_ref[0, 0:1, :] = tsum
    stats_ref[0, 1:2, :] = jnp.sum(d * d, axis=0, keepdims=True)

    y_ref[...] = acc.reshape(TB, H, Wa, Cp).astype(y_ref.dtype)


def bn_residual_relu_kernel(y_ref, res_ref, scale_ref, bias_ref, out_ref):
    """out = relu(scale*y + bias + residual) -- folded BN2 epilogue, lane-dense."""
    y = y_ref[...].astype(jnp.float32)
    r = res_ref[...].astype(jnp.float32)
    out_ref[...] = jnp.maximum(scale_ref[...] * y + bias_ref[...] + r,
                               0.0).astype(out_ref.dtype)


def basic_block_forward(x_nchw, w1_oihw, g1, b1, w2_oihw, g2, b2,
                        *, compute_dtype=jnp.bfloat16):
    """BasicBlock forward (stride=1, downsample=None, training-mode BatchNorm).

    PyTorch NCHW / OIHW in and out; NHWC inside, W aligned to 8 sublanes and channels
    zero-padded to 128 lanes.  Three batch-tiled Pallas passes with exact global BN.
    """
    N, C, H, W = x_nchw.shape
    P = w1_oihw.shape[0]
    assert w1_oihw.shape[1] == C and w2_oihw.shape[0] == w2_oihw.shape[1] == P
    assert C == P, "identity residual requires inplanes == planes (default config)"
    # TODO(synk): stride != 1 / downsample branch not implemented (default ctor args).

    Cp = -(-max(C, P) // LANES) * LANES
    Wa = -(-W // 8) * 8                       # sublane-aligned stored width
    cd = jnp.dtype(compute_dtype).itemsize

    # ---- VMEM budgeting & batch-tile selection ------------------------------
    try:
        info = pltpu.get_tpu_info()
        phys_vmem = int(getattr(info, "vmem_capacity_bytes", 64 * 1024 * 1024))
    except Exception:
        phys_vmem = 64 * 1024 * 1024          # conservative (v7x-sized) fallback
    vmem_limit = int(min((phys_vmem * 3) // 4, 96 * 1024 * 1024))
    tile_budget = (vmem_limit * 11) // 20     # ~55%: leave room for compiler scratch

    def vmem_estimate(tb):
        io = tb * H * Wa * Cp
        rows = tb * H * Wa
        dma = 3 * 2 * io * cd                 # <=3 activation streams, double-buffered
        wgt = 9 * Cp * Cp * cd
        tmp = rows * Cp * (16 * cd + 8)       # shifted copies + im2col patches + f32 acc
        return dma + wgt + tmp

    cap = N if N == 1 else N // 2             # keep >= 2 grid steps for megacore/v7x
    tile_n = 1
    for tb in range(1, cap + 1):
        if N % tb == 0 and vmem_estimate(tb) <= tile_budget:
            tile_n = tb
    nt = N // tile_n

    # ---- layouts: NHWC, W aligned to 8, channels zero-padded to 128 lanes ---
    x_nhwc = jnp.transpose(x_nchw, (0, 2, 3, 1))
    x_c = jnp.pad(x_nhwc, ((0, 0), (0, 0), (0, Wa - W), (0, Cp - C))
                  ).astype(compute_dtype)     # conv1 operand AND pass-3 residual

    def prep_w(w_oihw):
        w = jnp.transpose(w_oihw, (2, 3, 1, 0))                  # OIHW -> HWIO
        w = jnp.pad(w, ((0, 0), (0, 0),
                        (0, Cp - w.shape[2]), (0, Cp - w.shape[3])))
        return w.reshape(9 * Cp, Cp).astype(compute_dtype)       # K-packed (kh,kw,ci)

    def prep_v(v):
        return jnp.pad(v.astype(jnp.float32), (0, Cp - v.shape[0])).reshape(1, Cp)

    w1p, w2p = prep_w(w1_oihw), prep_w(w2_oihw)
    g1p, b1p, g2p, b2p = prep_v(g1), prep_v(b1), prep_v(g2), prep_v(b2)
    ones = jnp.ones((1, Cp), jnp.float32)
    zeros = jnp.zeros((1, Cp), jnp.float32)

    cparams = pltpu.CompilerParams(
        dimension_semantics=("parallel",),        # shards batch tiles across TCs
        vmem_limit_bytes=vmem_limit)

    act_spec = pl.BlockSpec((tile_n, H, Wa, Cp), lambda i: (i, 0, 0, 0))
    vec_spec = pl.BlockSpec((1, Cp), lambda i: (0, 0))
    wgt_spec = pl.BlockSpec((9 * Cp, Cp), lambda i: (0, 0))
    st_spec = pl.BlockSpec((1, 2, Cp), lambda i: (i, 0, 0))

    act_bytes = N * H * Wa * Cp * cd
    conv_cost = pl.CostEstimate(
        flops=2 * N * H * Wa * 9 * Cp * Cp,
        transcendentals=0,
        bytes_accessed=2 * act_bytes + 9 * Cp * Cp * cd + nt * 2 * Cp * 4)
    epi_cost = pl.CostEstimate(
        flops=4 * N * H * Wa * Cp,
        transcendentals=0,
        bytes_accessed=3 * act_bytes)

    def conv_pass(x_in, w, scale, bias, *, bn_relu_input):
        kern = functools.partial(conv3x3_k9_kernel,
                                 bn_relu_input=bn_relu_input, valid_w=W)
        return pl.pallas_call(
            kern,
            grid=(nt,),
            in_specs=[act_spec, wgt_spec, vec_spec, vec_spec],
            out_specs=(act_spec, st_spec),
            out_shape=(jax.ShapeDtypeStruct((N, H, Wa, Cp), compute_dtype),
                       jax.ShapeDtypeStruct((nt, 2, Cp), jnp.float32)),
            compiler_params=cparams,
            cost_estimate=conv_cost,
        )(x_in, w, scale, bias)

    tile_count = tile_n * H * W
    total_count = N * H * W

    def fold_bn(stats, gamma, beta):
        # Chan parallel combination of per-tile (sum, centered sum of squares).
        tsum = stats[:, 0, :]                                     # (nt, Cp)
        tcss = stats[:, 1, :]
        gmean = jnp.sum(tsum, axis=0) / total_count
        tmean = tsum / tile_count
        var = (jnp.sum(tcss, axis=0)
               + tile_count * jnp.sum((tmean - gmean) ** 2, axis=0)) / total_count
        var = jnp.maximum(var, 0.0)
        scale = gamma[0] * lax.rsqrt(var + EPS)
        bias = beta[0] - gmean * scale
        return scale.reshape(1, Cp), bias.reshape(1, Cp)

    # pass 1: conv1 (+ BN1 centered partial statistics)
    y1, st1 = conv_pass(x_c, w1p, ones, zeros, bn_relu_input=False)
    scale1, bias1 = fold_bn(st1, g1p, b1p)

    # pass 2: folded BN1 + ReLU, then conv2 (+ BN2 centered partial statistics)
    y2, st2 = conv_pass(y1, w2p, scale1, bias1, bn_relu_input=True)
    scale2, bias2 = fold_bn(st2, g2p, b2p)

    # pass 3: folded BN2 + identity residual + ReLU (memory-bound epilogue)
    out = pl.pallas_call(
        bn_residual_relu_kernel,
        grid=(nt,),
        in_specs=[act_spec, act_spec, vec_spec, vec_spec],
        out_specs=act_spec,
        out_shape=jax.ShapeDtypeStruct((N, H, Wa, Cp), compute_dtype),
        compiler_params=cparams,
        cost_estimate=epi_cost,
    )(y2, x_c, scale2, bias2)

    out = out[:, :, :W, :C].astype(jnp.float32)
    return jnp.transpose(out, (0, 3, 1, 2))                       # back to NCHW


def reference_forward(x, w1, g1, b1, w2, g2, b2):
    """Pure-JAX f32 reference matching the PyTorch module (training-mode BN)."""
    def conv(a, w):
        return lax.conv_general_dilated(a, w, (1, 1), ((1, 1), (1, 1)),
                                        dimension_numbers=('NCHW', 'OIHW', 'NCHW'))

    def bn(a, g, b):
        mean = jnp.mean(a, axis=(0, 2, 3), keepdims=True)
        var = jnp.mean((a - mean) ** 2, axis=(0, 2, 3), keepdims=True)
        return (g.reshape(1, -1, 1, 1) * (a - mean) * lax.rsqrt(var + EPS)
                + b.reshape(1, -1, 1, 1))

    out = jax.nn.relu(bn(conv(x, w1), g1, b1))
    out = bn(conv(out, w2), g2, b2)
    return jax.nn.relu(out + x)


if __name__ == "__main__":
    key = jax.random.PRNGKey(0)
    ks = jax.random.split(key, 7)

    # Small shapes consistent with BasicBlock(inplanes=4, planes=4, stride=1)
    N, C, H, W = 2, 4, 16, 16
    P = C

    x = jax.random.normal(ks[0], (N, C, H, W), jnp.float32)
    w1 = jax.random.normal(ks[1], (P, C, 3, 3), jnp.float32) * (2.0 / (C * 9)) ** 0.5
    w2 = jax.random.normal(ks[2], (P, P, 3, 3), jnp.float32) * (2.0 / (P * 9)) ** 0.5
    g1 = 1.0 + 0.1 * jax.random.normal(ks[3], (P,), jnp.float32)
    b1 = 0.1 * jax.random.normal(ks[4], (P,), jnp.float32)
    g2 = 1.0 + 0.1 * jax.random.normal(ks[5], (P,), jnp.float32)
    b2 = 0.1 * jax.random.normal(ks[6], (P,), jnp.float32)

    ref = reference_forward(x, w1, g1, b1, w2, g2, b2)

    # f32 compute path: tight check against the f32 reference.
    out_f32 = jax.block_until_ready(
        basic_block_forward(x, w1, g1, b1, w2, g2, b2, compute_dtype=jnp.float32))
    assert out_f32.shape == (N, P, H, W)
    assert jnp.allclose(out_f32, ref, atol=1e-3, rtol=1e-3), \
        float(jnp.max(jnp.abs(out_f32 - ref)))

    # bf16 MXU-operand fast path (default): looser check (bf16 rounding of operands,
    # activations, residual and output streams).
    out_bf16 = jax.block_until_ready(
        basic_block_forward(x, w1, g1, b1, w2, g2, b2, compute_dtype=jnp.bfloat16))
    assert out_bf16.shape == (N, P, H, W)
    assert jnp.allclose(out_bf16, ref, atol=1e-1, rtol=1e-1), \
        float(jnp.max(jnp.abs(out_bf16 - ref)))

    print("KERNEL_OK")
</pallas_src>

<mosaic_0001>
module attributes {stable_mosaic.version = 11 : i64} {
  func.func @conv3x3_k9_kernel(%arg0: i32, %arg1: memref<1x16x16x128xf32, #tpu.memory_space<vmem>>, %arg2: memref<1152x128xf32, #tpu.memory_space<vmem>>, %arg3: memref<1x128xf32, #tpu.memory_space<vmem>>, %arg4: memref<1x128xf32, #tpu.memory_space<vmem>>, %arg5: memref<1x16x16x128xf32, #tpu.memory_space<vmem>>, %arg6: memref<1x2x128xf32, #tpu.memory_space<vmem>>) attributes {dimension_semantics = [#tpu.dimension_semantics<parallel>], iteration_bounds = array<i64: 2>, scalar_prefetch = 0 : i64, scratch_operands = 0 : i64, tpu.core_type = #tpu.core_type<tc>, window_params = [{transform_indices = @transform_0, window_bounds = array<i64: 1, 16, 16, 128>}, {pipeline_mode = #tpu.pipeline_mode<synchronous>, transform_indices = @transform_1, window_bounds = array<i64: 1152, 128>}, {pipeline_mode = #tpu.pipeline_mode<synchronous>, transform_indices = @transform_2, window_bounds = array<i64: 1, 128>}, {pipeline_mode = #tpu.pipeline_mode<synchronous>, transform_indices = @transform_3, window_bounds = array<i64: 1, 128>}, {transform_indices = @transform_4, window_bounds = array<i64: 1, 16, 16, 128>}, {transform_indices = @transform_5, window_bounds = array<i64: 1, 2, 128>}]} {
    %c0 = arith.constant 0 : index
    %c0_0 = arith.constant 0 : index
    %c0_1 = arith.constant 0 : index
    %c0_2 = arith.constant 0 : index
    %0 = vector.load %arg1[%c0, %c0_0, %c0_1, %c0_2] : memref<1x16x16x128xf32, #tpu.memory_space<vmem>>, vector<1x16x16x128xf32>
    %cst = arith.constant 0.000000e+00 : f32
    %1 = vector.broadcast %cst : f32 to vector<1x1x16x128xf32>
    %cst_3 = arith.constant 0.000000e+00 : f32
    %2 = vector.broadcast %cst_3 : f32 to vector<1x16x1x128xf32>
    %3 = vector.extract_strided_slice %0 {offsets = [0, 0, 0, 0], sizes = [1, 16, 15, 128], strides = [1, 1, 1, 1]} : vector<1x16x16x128xf32> to vector<1x16x15x128xf32>
    %4 = tpu.concatenate %2, %3 in 2 : vector<1x16x1x128xf32>, vector<1x16x15x128xf32> -> vector<1x16x16x128xf32>
    %5 = vector.extract_strided_slice %0 {offsets = [0, 0, 1, 0], sizes = [1, 16, 15, 128], strides = [1, 1, 1, 1]} : vector<1x16x16x128xf32> to vector<1x16x15x128xf32>
    %6 = tpu.concatenate %5, %2 in 2 : vector<1x16x15x128xf32>, vector<1x16x1x128xf32> -> vector<1x16x16x128xf32>
    %7 = vector.extract_strided_slice %4 {offsets = [0, 0, 0, 0], sizes = [1, 15, 16, 128], strides = [1, 1, 1, 1]} : vector<1x16x16x128xf32> to vector<1x15x16x128xf32>
    %8 = tpu.concatenate %1, %7 in 1 : vector<1x1x16x128xf32>, vector<1x15x16x128xf32> -> vector<1x16x16x128xf32>
    %9 = vector.extract_strided_slice %0 {offsets = [0, 0, 0, 0], sizes = [1, 15, 16, 128], strides = [1, 1, 1, 1]} : vector<1x16x16x128xf32> to vector<1x15x16x128xf32>
    %10 = tpu.concatenate %1, %9 in 1 : vector<1x1x16x128xf32>, vector<1x15x16x128xf32> -> vector<1x16x16x128xf32>
    %11 = vector.extract_strided_slice %6 {offsets = [0, 0, 0, 0], sizes = [1, 15, 16, 128], strides = [1, 1, 1, 1]} : vector<1x16x16x128xf32> to vector<1x15x16x128xf32>
    %12 = tpu.concatenate %1, %11 in 1 : vector<1x1x16x128xf32>, vector<1x15x16x128xf32> -> vector<1x16x16x128xf32>
    %13 = vector.extract_strided_slice %4 {offsets = [0, 1, 0, 0], sizes = [1, 15, 16, 128], strides = [1, 1, 1, 1]} : vector<1x16x16x128xf32> to vector<1x15x16x128xf32>
    %14 = tpu.concatenate %13, %1 in 1 : vector<1x15x16x128xf32>, vector<1x1x16x128xf32> -> vector<1x16x16x128xf32>
    %15 = vector.extract_strided_slice %0 {offsets = [0, 1, 0, 0], sizes = [1, 15, 16, 128], strides = [1, 1, 1, 1]} : vector<1x16x16x128xf32> to vector<1x15x16x128xf32>
    %16 = tpu.concatenate %15, %1 in 1 : vector<1x15x16x128xf32>, vector<1x1x16x128xf32> -> vector<1x16x16x128xf32>
    %17 = vector.extract_strided_slice %6 {offsets = [0, 1, 0, 0], sizes = [1, 15, 16, 128], strides = [1, 1, 1, 1]} : vector<1x16x16x128xf32> to vector<1x15x16x128xf32>
    %18 = tpu.concatenate %17, %1 in 1 : vector<1x15x16x128xf32>, vector<1x1x16x128xf32> -> vector<1x16x16x128xf32>
    %19 = tpu.concatenate %8, %10, %12, %4, %0, %6, %14, %16, %18 in 3 : vector<1x16x16x128xf32>, vector<1x16x16x128xf32>, vector<1x16x16x128xf32>, vector<1x16x16x128xf32>, vector<1x16x16x128xf32>, vector<1x16x16x128xf32>, vector<1x16x16x128xf32>, vector<1x16x16x128xf32>, vector<1x16x16x128xf32> -> vector<1x16x16x1152xf32>
    %20 = vector.shape_cast %19 : vector<1x16x16x1152xf32> to vector<256x1152xf32>
    %c0_4 = arith.constant 0 : index
    %c0_5 = arith.constant 0 : index
    %21 = vector.load %arg2[%c0_4, %c0_5] : memref<1152x128xf32, #tpu.memory_space<vmem>>, vector<1152x128xf32>
    %cst_6 = arith.constant dense<0.000000e+00> : vector<256x128xf32>
    %22 = tpu.matmul %20, %21, %cst_6 {dimension_numbers = #tpu.dot_dimension_numbers<[1], [0], [0], [1], [0, 0, 1, 1], [], []>} : vector<256x1152xf32>, vector<1152x128xf32>, vector<256x128xf32> -> vector<256x128xf32>
    %cst_7 = arith.constant dense<0.000000e+00> : vector<128xf32>
    %23 = vector.multi_reduction <add>, %22, %cst_7 [0] : vector<256x128xf32> to vector<128xf32>
    %24 = vector.shape_cast %23 : vector<128xf32> to vector<1x128xf32>
    %cst_8 = arith.constant 3.906250e-03 : f32
    %25 = vector.broadcast %cst_8 : f32 to vector<1x128xf32>
    %26 = arith.mulf %24, %25 : vector<1x128xf32>
    %27 = vector.broadcast %26 : vector<1x128xf32> to vector<256x128xf32>
    %28 = arith.subf %22, %27 : vector<256x128xf32>
    %c0_9 = arith.constant 0 : index
    %c0_10 = arith.constant 0 : index
    %c0_11 = arith.constant 0 : index
    %29 = vector.load %arg6[%c0_9, %c0_10, %c0_11] : memref<1x2x128xf32, #tpu.memory_space<vmem>>, vector<1x1x128xf32>
    %30 = vector.shape_cast %29 : vector<1x1x128xf32> to vector<1x128xf32>
    %31 = vector.shape_cast %24 : vector<1x128xf32> to vector<1x1x128xf32>
    tpu.vector_store %arg6[%c0_9, %c0_10, %c0_11], %31 {strides = array<i32>} : memref<1x2x128xf32, #tpu.memory_space<vmem>>, vector<1x1x128xf32>,
    %32 = arith.mulf %28, %28 : vector<256x128xf32>
    %cst_12 = arith.constant dense<0.000000e+00> : vector<128xf32>
    %33 = vector.multi_reduction <add>, %32, %cst_12 [0] : vector<256x128xf32> to vector<128xf32>
    %34 = vector.shape_cast %33 : vector<128xf32> to vector<1x128xf32>
    %c0_13 = arith.constant 0 : index
    %c1 = arith.constant 1 : index
    %c0_14 = arith.constant 0 : index
    %35 = vector.load %arg6[%c0_13, %c1, %c0_14] : memref<1x2x128xf32, #tpu.memory_space<vmem>>, vector<1x1x128xf32>
    %36 = vector.shape_cast %35 : vector<1x1x128xf32> to vector<1x128xf32>
    %37 = vector.shape_cast %34 : vector<1x128xf32> to vector<1x1x128xf32>
    tpu.vector_store %arg6[%c0_13, %c1, %c0_14], %37 {strides = array<i32>} : memref<1x2x128xf32, #tpu.memory_space<vmem>>, vector<1x1x128xf32>,
    %38 = vector.shape_cast %22 : vector<256x128xf32> to vector<1x16x16x128xf32>
    %c0_15 = arith.constant 0 : index
    %c0_16 = arith.constant 0 : index
    %c0_17 = arith.constant 0 : index
    %c0_18 = arith.constant 0 : index
    %39 = vector.load %arg5[%c0_15, %c0_16, %c0_17, %c0_18] : memref<1x16x16x128xf32, #tpu.memory_space<vmem>>, vector<1x16x16x128xf32>
    tpu.vector_store %arg5[%c0_15, %c0_16, %c0_17, %c0_18], %38 {strides = array<i32>} : memref<1x16x16x128xf32, #tpu.memory_space<vmem>>, vector<1x16x16x128xf32>,
    return
  }
  func.func @transform_0(%arg0: i32) -> (i32, i32, i32, i32) {
    %c0_i32 = arith.constant 0 : i32
    %c0_i32_0 = arith.constant 0 : i32
    %c0_i32_1 = arith.constant 0 : i32
    %c0_i32_2 = arith.constant 0 : i32
    return %arg0, %c0_i32, %c0_i32_0, %c0_i32_1 : i32, i32, i32, i32
  }
  func.func @transform_1(%arg0: i32) -> (i32, i32) {
    %c0_i32 = arith.constant 0 : i32
    %c0_i32_0 = arith.constant 0 : i32
    %c0_i32_1 = arith.constant 0 : i32
    return %c0_i32, %c0_i32_0 : i32, i32
  }
  func.func @transform_2(%arg0: i32) -> (i32, i32) {
    %c0_i32 = arith.constant 0 : i32
    %c0_i32_0 = arith.constant 0 : i32
    %c0_i32_1 = arith.constant 0 : i32
    return %c0_i32, %c0_i32_0 : i32, i32
  }
  func.func @transform_3(%arg0: i32) -> (i32, i32) {
    %c0_i32 = arith.constant 0 : i32
    %c0_i32_0 = arith.constant 0 : i32
    %c0_i32_1 = arith.constant 0 : i32
    return %c0_i32, %c0_i32_0 : i32, i32
  }
  func.func @transform_4(%arg0: i32) -> (i32, i32, i32, i32) {
    %c0_i32 = arith.constant 0 : i32
    %c0_i32_0 = arith.constant 0 : i32
    %c0_i32_1 = arith.constant 0 : i32
    %c0_i32_2 = arith.constant 0 : i32
    return %arg0, %c0_i32, %c0_i32_0, %c0_i32_1 : i32, i32, i32, i32
  }
  func.func @transform_5(%arg0: i32) -> (i32, i32, i32) {
    %c0_i32 = arith.constant 0 : i32
    %c0_i32_0 = arith.constant 0 : i32
    %c0_i32_1 = arith.constant 0 : i32
    return %arg0, %c0_i32, %c0_i32_0 : i32, i32, i32
  }
}

</mosaic_0001>

<llo_original>
// kernel: tpu_custom_call.1
$region0: #{tpu_custom_call.1}
  #allocation0 [shape = 'u32[]', space=smem, size = 0x4, offset = 0x4, fixed_abs, tag = 'smem constant byte address 0x4 - core index']
  #allocation1 [shape = 'u32[144,128]{1,0:T(1,128)}', space=vmem, size = 0x12000, scoped, tag = 'internal scratch']
  %s0 = inlined_call_operand.hbm [shape: f32[2,16,16,128], index: 0, kind: input, shape index: {}]
  %s1 = inlined_call_operand.hbm [shape: f32[1152,128], index: 1, kind: input, shape index: {}]
  %s2 = inlined_call_operand.vmem [shape: f32[1,128], index: 2, kind: input, shape index: {}]
  %s3 = inlined_call_operand.vmem [shape: f32[1,128], index: 3, kind: input, shape index: {}]
  %s4 = inlined_call_operand.hbm [shape: f32[2,16,16,128], index: 4, kind: output, shape index: {0}]
  %s5 = inlined_call_operand.hbm [shape: f32[2,2,128], index: 5, kind: output, shape index: {1}]
  %6 = xla_tuple %s4, %s5
  %s7 = sld [smem:[#allocation0]]
  $region65: #{tpu_custom_call.1} parent=0
    _
  %s9 = ssub.s32 1, %s7
  %s10 = scalar_select 0, %s9, %s7
  $region1: #{tpu_custom_call.1} parent=0
    #allocation2 [shape = 'u8[262144]{0}', space=vmem, size = 0x40000, scoped, tag = 'input window, operand 0']
    #allocation3 [shape = 's32[2]{0}', space=sflag, size = 0x8, scoped, tag = 'scoped memory for tpu_custom_call.1']
    #allocation4 [shape = 's32[2]{0}', space=sflag, size = 0x8, scoped, tag = 'scoped memory for tpu_custom_call.1']
    #allocation5 [shape = 'u8[589824]{0}', space=vmem, size = 0x90000, scoped, tag = 'input window, operand 1, single buffered']
    #allocation6 [shape = 's32[1]{0}', space=sflag, size = 0x4, scoped, tag = 'scoped memory for tpu_custom_call.1']
    #allocation7 [shape = 'u8[262144]{0}', space=vmem, size = 0x40000, scoped, tag = 'output window, operand 0']
    #allocation8 [shape = 'u8[2048]{0}', space=vmem, size = 0x800, scoped, tag = 'output window, operand 1']
    #allocation9 [shape = 's32[2]{0}', space=sflag, size = 0x8, scoped, tag = 'scoped memory for tpu_custom_call.1']
    %11 = vsyncpa [#allocation3], 0
    %s12 = scalar_lea.sflag [#allocation3], 1
    %13 = vsyncpa %s12, 0
    %14 = vsyncpa [#allocation6], 0
    %15 = vsyncpa [#allocation4], 0
    %s16 = scalar_lea.sflag [#allocation4], 1
    %17 = vsyncpa %s16, 0
    %18 = vsyncpa [#allocation9], 0
    %s19 = scalar_lea.sflag [#allocation9], 1
    %20 = vsyncpa %s19, 0
    loop: start=0, step=1, limit=4
    $region2: #{tpu_custom_call.1} parent=1 // loop_pre_header
      _
    $region3: #{tpu_custom_call.1} parent=1 // loop_header
      %s22 = sphi 0, %s26
      %p23 = scmp.ge.s32.totalorder %s22, 4
      %s32 = sphi 0, %s34
      %s35 = sphi 0, %s32
      %s36 = sphi 0, %s35
      %s52 = sphi 0, %s36
      %s56 = sphi 0, %s56
      %s58 = sphi 0, %s56
      %s59 = sphi 0, %s58
      %s73 = sphi 0, %s59
      %s77 = sphi 0, %s77
      %s79 = sphi 0, %s77
      %s80 = sphi 0, %s79
      %s94 = sphi 0, %s80
      %s98 = sphi 0, %s98
      %s100 = sphi 0, %s98
      %s101 = sphi 0, %s100
      %s115 = sphi 0, %s101
      %s121 = sphi 0, %s123
      %s124 = sphi 0, %s121
      %s125 = sphi 0, %s124
      %s141 = sphi 0, %s125
      %s147 = sphi 0, %s149
      %s150 = sphi 0, %s147
      %s151 = sphi 0, %s150
      %s167 = sphi 0, %s151
    $region4: #{tpu_custom_call.1} parent=1 // loop_header_branch
      %25 = sbr.rel (%p23) target = $region8
    $region5: #{tpu_custom_call.1} parent=1 // loop_body
      %s27 = ssub.s32 %s22, 1
      %s28 = ssub.s32 %s22, 2
      %s29 = sadd.s32 %s22, 1
      %s30 = ssub.s32 %s22, %s29
      %p31 = scmp.eq.s32.totalorder %s30, 0
      %s33 = sadd.s32 %s32, 1
      %s34 = scalar_select %p31, %s32, %s33
      %p37 = pneg %p31
      %p38 = scmp.eq.s32.totalorder %s22, 1
      %p39 = por %p37, %p38
      %p40 = scmp.ne.s32.totalorder %s32, %s35
      %p41 = scmp.eq.s32.totalorder %s22, 0
      %p42 = por %p40, %p41
      %p43 = scmp.ne.s32.totalorder %s32, %s35
      %p44 = scmp.eq.s32.totalorder %s27, 1
      %p45 = por %p43, %p44
      %p46 = scmp.ne.s32.totalorder %s35, %s36
      %p47 = scmp.eq.s32.totalorder %s27, 0
      %p48 = por %p46, %p47
      %p49 = scmp.ne.s32.totalorder %s35, %s36
      %p50 = scmp.eq.s32.totalorder %s28, 1
      %p51 = por %p49, %p50
      %p53 = scmp.ne.s32.totalorder %s36, %s52
      %p54 = scmp.eq.s32.totalorder %s28, 0
      %p55 = por %p53, %p54
      %s57 = sadd.s32 %s56, 1
      %p60 = scmp.eq.s32.totalorder %s22, 1
      %p61 = scmp.ne.s32.totalorder %s56, %s58
      %p62 = scmp.eq.s32.totalorder %s22, 0
      %p63 = por %p61, %p62
      %p64 = scmp.ne.s32.totalorder %s56, %s58
      %p65 = scmp.eq.s32.totalorder %s27, 1
      %p66 = por %p64, %p65
      %p67 = scmp.ne.s32.totalorder %s58, %s59
      %p68 = scmp.eq.s32.totalorder %s27, 0
      %p69 = por %p67, %p68
      %p70 = scmp.ne.s32.totalorder %s58, %s59
      %p71 = scmp.eq.s32.totalorder %s28, 1
      %p72 = por %p70, %p71
      %p74 = scmp.ne.s32.totalorder %s59, %s73
      %p75 = scmp.eq.s32.totalorder %s28, 0
      %p76 = por %p74, %p75
      %s78 = sadd.s32 %s77, 1
      %p81 = scmp.eq.s32.totalorder %s22, 1
      %p82 = scmp.ne.s32.totalorder %s77, %s79
      %p83 = scmp.eq.s32.totalorder %s22, 0
      %p84 = por %p82, %p83
      %p85 = scmp.ne.s32.totalorder %s77, %s79
      %p86 = scmp.eq.s32.totalorder %s27, 1
      %p87 = por %p85, %p86
      %p88 = scmp.ne.s32.totalorder %s79, %s80
      %p89 = scmp.eq.s32.totalorder %s27, 0
      %p90 = por %p88, %p89
      %p91 = scmp.ne.s32.totalorder %s79, %s80
      %p92 = scmp.eq.s32.totalorder %s28, 1
      %p93 = por %p91, %p92
      %p95 = scmp.ne.s32.totalorder %s80, %s94
      %p96 = scmp.eq.s32.totalorder %s28, 0
      %p97 = por %p95, %p96
      %s99 = sadd.s32 %s98, 1
      %p102 = scmp.eq.s32.totalorder %s22, 1
      %p103 = scmp.ne.s32.totalorder %s98, %s100
      %p104 = scmp.eq.s32.totalorder %s22, 0
      %p105 = por %p103, %p104
      %p106 = scmp.ne.s32.totalorder %s98, %s100
      %p107 = scmp.eq.s32.totalorder %s27, 1
      %p108 = por %p106, %p107
      %p109 = scmp.ne.s32.totalorder %s100, %s101
      %p110 = scmp.eq.s32.totalorder %s27, 0
      %p111 = por %p109, %p110
      %p112 = scmp.ne.s32.totalorder %s100, %s101
      %p113 = scmp.eq.s32.totalorder %s28, 1
      %p114 = por %p112, %p113
      %p116 = scmp.ne.s32.totalorder %s101, %s115
      %p117 = scmp.eq.s32.totalorder %s28, 0
      %p118 = por %p116, %p117
      %s119 = ssub.s32 %s22, %s29
      %p120 = scmp.eq.s32.totalorder %s119, 0
      %s122 = sadd.s32 %s121, 1
      %s123 = scalar_select %p120, %s121, %s122
      %p126 = pneg %p120
      %p127 = scmp.eq.s32.totalorder %s22, 1
      %p128 = por %p126, %p127
      %p129 = scmp.ne.s32.totalorder %s121, %s124
      %p130 = scmp.eq.s32.totalorder %s22, 0
      %p131 = por %p129, %p130
      %p132 = scmp.ne.s32.totalorder %s121, %s124
      %p133 = scmp.eq.s32.totalorder %s27, 1
      %p134 = por %p132, %p133
      %p135 = scmp.ne.s32.totalorder %s124, %s125
      %p136 = scmp.eq.s32.totalorder %s27, 0
      %p137 = por %p135, %p136
      %p138 = scmp.ne.s32.totalorder %s124, %s125
      %p139 = scmp.eq.s32.totalorder %s28, 1
      %p140 = por %p138, %p139
      %p142 = scmp.ne.s32.totalorder %s125, %s141
      %p143 = scmp.eq.s32.totalorder %s28, 0
      %p144 = por %p142, %p143
      %s145 = ssub.s32 %s22, %s29
      %p146 = scmp.eq.s32.totalorder %s145, 0
      %s148 = sadd.s32 %s147, 1
      %s149 = scalar_select %p146, %s147, %s148
      %p152 = pneg %p146
      %p153 = scmp.eq.s32.totalorder %s22, 1
      %p154 = por %p152, %p153
      %p155 = scmp.ne.s32.totalorder %s147, %s150
      %p156 = scmp.eq.s32.totalorder %s22, 0
      %p157 = por %p155, %p156
      %p158 = scmp.ne.s32.totalorder %s147, %s150
      %p159 = scmp.eq.s32.totalorder %s27, 1
      %p160 = por %p158, %p159
      %p161 = scmp.ne.s32.totalorder %s150, %s151
      %p162 = scmp.eq.s32.totalorder %s27, 0
      %p163 = por %p161, %p162
      %p164 = scmp.ne.s32.totalorder %s150, %s151
      %p165 = scmp.eq.s32.totalorder %s28, 1
      %p166 = por %p164, %p165
      %p168 = scmp.ne.s32.totalorder %s151, %s167
      %p169 = scmp.eq.s32.totalorder %s28, 0
      %p170 = por %p168, %p169
      %p171 = scmp.le.s32.totalorder 1, %s22
      %p172 = scmp.lt.s32.totalorder %s22, 3
      %p173 = pnand %p171, %p172
      %p174 = pneg %p173
      // Predicated region
      $region9: #{tpu_custom_call.1} parent=5 // pred_check
        _
      $region10: #{tpu_custom_call.1} parent=5 // pred_check_branch
        %176 = sbr.rel (%p173) target = $region12
      $region11: #{tpu_custom_call.1} parent=5 // pred_region
        %s177 = ssub.s32 %s22, 1
        // Predicated region
        $region13: #{tpu_custom_call.1} parent=11 // pred_check
          %p178 = pneg %p69
        $region14: #{tpu_custom_call.1} parent=11 // pred_check_branch
          %180 = sbr.rel (%p178) target = $region16
        $region15: #{tpu_custom_call.1} parent=11 // pred_region
          %s182 = ssub.s32 18432, 18432
          %183 = vsyncadd [#allocation6], %s182
          %s184 = sshll.u32 [#allocation5], 4
          %s185 = int_to_ptr.vmem [resolvable:$true] %s184
          %190 = dma.hbm_to_vmem [thread:$0]  %s1, 18432, %s185, [#allocation6], 128, 128, 8
        $region16: #{tpu_custom_call.1} parent=11 // pred_fallthru
          _
        // Predicated region
        $region17: #{tpu_custom_call.1} parent=11 // pred_check
          %p191 = pneg %p90
        $region18: #{tpu_custom_call.1} parent=11 // pred_check_branch
          %193 = sbr.rel (%p191) target = $region20
        $region19: #{tpu_custom_call.1} parent=11 // pred_region
          _
        $region20: #{tpu_custom_call.1} parent=11 // pred_fallthru
          _
        // Predicated region
        $region21: #{tpu_custom_call.1} parent=11 // pred_check
          %p194 = pneg %p111
        $region22: #{tpu_custom_call.1} parent=11 // pred_check_branch
          %196 = sbr.rel (%p194) target = $region24
        $region23: #{tpu_custom_call.1} parent=11 // pred_region
          _
        $region24: #{tpu_custom_call.1} parent=11 // pred_fallthru
          _
      $region12: #{tpu_custom_call.1} parent=5 // pred_fallthru
        _
      %p197 = scmp.lt.s32.totalorder %s22, 2
      // Predicated region
      $region25: #{tpu_custom_call.1} parent=5 // pred_check
        %p198 = pneg %p197
      $region26: #{tpu_custom_call.1} parent=5 // pred_check_branch
        %200 = sbr.rel (%p198) target = $region28
      $region27: #{tpu_custom_call.1} parent=5 // pred_region
        // Predicated region
        $region29: #{tpu_custom_call.1} parent=27 // pred_check
          %p201 = pneg %p42
        $region30: #{tpu_custom_call.1} parent=27 // pred_check_branch
          %203 = sbr.rel (%p201) target = $region32
        $region31: #{tpu_custom_call.1} parent=27 // pred_region
          %s204 = sand.u32 %s32, 1
          %s205 = scalar_lea.sflag [#allocation3], %s204
          %s206 = sand.u32 %s32, 1
          %s207 = smul.addr %s206, 256
          %s208 = scalar_lea.vmem [#allocation2], %s207
          %s210 = ssub.s32 4096, 4096
          %211 = vsyncadd %s205, %s210
          %s212 = smul.addr %s22, 32
          %s213 = smul.addr %s212, 128
          %s214 = scalar_lea.hbm %s0, %s213
          %s215 = sshll.u32 %s208, 4
          %s216 = int_to_ptr.vmem [resolvable:$true] %s215
          %221 = dma.hbm_to_vmem [thread:$0]  %s214, 4096, %s216, %s205, 128, 128, 8
        $region32: #{tpu_custom_call.1} parent=27 // pred_fallthru
          _
      $region28: #{tpu_custom_call.1} parent=5 // pred_fallthru
        _
      %p222 = scmp.le.s32.totalorder 1, %s22
      %p223 = scmp.lt.s32.totalorder %s22, 3
      %p224 = pnand %p222, %p223
      %p225 = pneg %p224
      // Predicated region
      $region33: #{tpu_custom_call.1} parent=5 // pred_check
        _
      $region34: #{tpu_custom_call.1} parent=5 // pred_check_branch
        %227 = sbr.rel (%p224) target = $region36
      $region35: #{tpu_custom_call.1} parent=5 // pred_region
        %s228 = ssub.s32 %s22, 1
        %s229 = sand.u32 %s35, 1
        %s230 = scalar_lea.sflag [#allocation3], %s229
        %s231 = sand.u32 %s35, 1
        %s232 = smul.addr %s231, 256
        %s233 = scalar_lea.vmem [#allocation2], %s232
        // Predicated region
        $region37: #{tpu_custom_call.1} parent=35 // pred_check
          %p234 = pneg %p48
        $region38: #{tpu_custom_call.1} parent=35 // pred_check_branch
          %236 = sbr.rel (%p234) target = $region40
        $region39: #{tpu_custom_call.1} parent=35 // pred_region
          %237 = dma.done %s230, 4096
        $region40: #{tpu_custom_call.1} parent=35 // pred_fallthru
          _
        // Predicated region
        $region41: #{tpu_custom_call.1} parent=35 // pred_check
          %p238 = pneg %p69
        $region42: #{tpu_custom_call.1} parent=35 // pred_check_branch
          %240 = sbr.rel (%p238) target = $region44
        $region43: #{tpu_custom_call.1} parent=35 // pred_region
          %241 = dma.done [#allocation6], 18432
        $region44: #{tpu_custom_call.1} parent=35 // pred_fallthru
          _
        %s242 = sand.u32 %s35, 1
        %s243 = scalar_lea.sflag [#allocation3], %s242
        %s244 = sand.u32 %s35, 1
        %s245 = smul.addr %s244, 256
        %s246 = scalar_lea.vmem [#allocation2], %s245
        %p247 = pneg %p48
        %p248 = pneg %p45
        %p249 = pneg %p69
        %p250 = pneg %p66
        %p251 = pneg %p90
        %p252 = pneg %p87
        %p253 = pneg %p111
        %p254 = pneg %p108
        %p255 = pneg %p137
        %p256 = pneg %p134
        %s257 = sand.u32 %s124, 1
        %s258 = scalar_lea.sflag [#allocation4], %s257
        %s259 = sand.u32 %s124, 1
        %s260 = smul.addr %s259, 256
        %s261 = scalar_lea.vmem [#allocation7], %s260
        %p262 = pneg %p163
        %p263 = pneg %p160
        %s264 = sand.u32 %s150, 1
        %s265 = scalar_lea.sflag [#allocation9], %s264
        %s266 = sand.u32 %s150, 1
        %s267 = smul.addr %s266, 2
        %s268 = scalar_lea.vmem [#allocation8], %s267
        %v269 = vld [vmem:[%s233] sm:$0xff]
        %v270 = vld [vmem:[%s233 + $0x8] sm:$0xff]
        %v271 = vld [vmem:[%s233 + $0x10] sm:$0xff]
        %v272 = vld [vmem:[%s233 + $0x18] sm:$0xff]
        %v273 = vld [vmem:[%s233 + $0x20] sm:$0xff]
        %v274 = vld [vmem:[%s233 + $0x28] sm:$0xff]
        %v275 = vld [vmem:[%s233 + $0x30] sm:$0xff]
        %v276 = vld [vmem:[%s233 + $0x38] sm:$0xff]
        %v277 = vld [vmem:[%s233 + $0x40] sm:$0xff]
        %v278 = vld [vmem:[%s233 + $0x48] sm:$0xff]
        %v279 = vld [vmem:[%s233 + $0x50] sm:$0xff]
        %v280 = vld [vmem:[%s233 + $0x58] sm:$0xff]
        %v281 = vld [vmem:[%s233 + $0x60] sm:$0xff]
        %v282 = vld [vmem:[%s233 + $0x68] sm:$0xff]
        %v283 = vld [vmem:[%s233 + $0x70] sm:$0xff]
        %v284 = vld [vmem:[%s233 + $0x78] sm:$0xff]
        %v285 = vld [vmem:[%s233 + $0x80] sm:$0xff]
        %v286 = vld [vmem:[%s233 + $0x88] sm:$0xff]
        %v287 = vld [vmem:[%s233 + $0x90] sm:$0xff]
        %v288 = vld [vmem:[%s233 + $0x98] sm:$0xff]
        %v289 = vld [vmem:[%s233 + $0xa0] sm:$0xff]
        %v290 = vld [vmem:[%s233 + $0xa8] sm:$0xff]
        %v291 = vld [vmem:[%s233 + $0xb0] sm:$0xff]
        %v292 = vld [vmem:[%s233 + $0xb8] sm:$0xff]
        %v293 = vld [vmem:[%s233 + $0xc0] sm:$0xff]
        %v294 = vld [vmem:[%s233 + $0xc8] sm:$0xff]
        %v295 = vld [vmem:[%s233 + $0xd0] sm:$0xff]
        %v296 = vld [vmem:[%s233 + $0xd8] sm:$0xff]
        %v297 = vld [vmem:[%s233 + $0xe0] sm:$0xff]
        %v298 = vld [vmem:[%s233 + $0xe8] sm:$0xff]
        %v299 = vld [vmem:[%s233 + $0xf0] sm:$0xff]
        %v300 = vld [vmem:[%s233 + $0xf8] sm:$0xff]
        %vm333 = vcmask 1040384
        %v334 = vrot.slane %v269, 7
        %v335 = vrot.slane %v270, 7
        %v336 = vsel %vm333, %v334, %v335
        %v337 = vrot.slane %v271, 7
        %v338 = vrot.slane %v272, 7
        %v339 = vsel %vm333, %v337, %v338
        %v340 = vrot.slane %v273, 7
        %v341 = vrot.slane %v274, 7
        %v342 = vsel %vm333, %v340, %v341
        %v343 = vrot.slane %v275, 7
        %v344 = vrot.slane %v276, 7
        %v345 = vsel %vm333, %v343, %v344
        %v346 = vrot.slane %v277, 7
        %v347 = vrot.slane %v278, 7
        %v348 = vsel %vm333, %v346, %v347
        %v349 = vrot.slane %v279, 7
        %v350 = vrot.slane %v280, 7
        %v351 = vsel %vm333, %v349, %v350
        %v352 = vrot.slane %v281, 7
        %v353 = vrot.slane %v282, 7
        %v354 = vsel %vm333, %v352, %v353
        %v355 = vrot.slane %v283, 7
        %v356 = vrot.slane %v284, 7
        %v357 = vsel %vm333, %v355, %v356
        %v358 = vrot.slane %v285, 7
        %v359 = vrot.slane %v286, 7
        %v360 = vsel %vm333, %v358, %v359
        %v361 = vrot.slane %v287, 7
        %v362 = vrot.slane %v288, 7
        %v363 = vsel %vm333, %v361, %v362
        %v364 = vrot.slane %v289, 7
        %v365 = vrot.slane %v290, 7
        %v366 = vsel %vm333, %v364, %v365
        %v367 = vrot.slane %v291, 7
        %v368 = vrot.slane %v292, 7
        %v369 = vsel %vm333, %v367, %v368
        %v370 = vrot.slane %v293, 7
        %v371 = vrot.slane %v294, 7
        %v372 = vsel %vm333, %v370, %v371
        %v373 = vrot.slane %v295, 7
        %v374 = vrot.slane %v296, 7
        %v375 = vsel %vm333, %v373, %v374
        %v376 = vrot.slane %v297, 7
        %v377 = vrot.slane %v298, 7
        %v378 = vsel %vm333, %v376, %v377
        %v379 = vrot.slane %v299, 7
        %v380 = vrot.slane %v300, 7
        %v381 = vsel %vm333, %v379, %v380
        %v414 = vsel %vm333, 0.0, %v334
        %v415 = vsel %vm333, 0.0, %v337
        %v416 = vsel %vm333, 0.0, %v340
        %v417 = vsel %vm333, 0.0, %v343
        %v418 = vsel %vm333, 0.0, %v346
        %v419 = vsel %vm333, 0.0, %v349
        %v420 = vsel %vm333, 0.0, %v352
        %v421 = vsel %vm333, 0.0, %v355
        %v422 = vsel %vm333, 0.0, %v358
        %v423 = vsel %vm333, 0.0, %v361
        %v424 = vsel %vm333, 0.0, %v364
        %v425 = vsel %vm333, 0.0, %v367
        %v426 = vsel %vm333, 0.0, %v370
        %v427 = vsel %vm333, 0.0, %v373
        %v428 = vsel %vm333, 0.0, %v376
        %v429 = vsel %vm333, 0.0, %v379
        %vm430 = vcmask 1046528
        %v431 = vrot.slane %v269, 1
        %v432 = vrot.slane %v270, 1
        %v433 = vsel %vm430, %v431, %v432
        %v434 = vrot.slane %v271, 1
        %v435 = vrot.slane %v272, 1
        %v436 = vsel %vm430, %v434, %v435
        %v437 = vrot.slane %v273, 1
        %v438 = vrot.slane %v274, 1
        %v439 = vsel %vm430, %v437, %v438
        %v440 = vrot.slane %v275, 1
        %v441 = vrot.slane %v276, 1
        %v442 = vsel %vm430, %v440, %v441
        %v443 = vrot.slane %v277, 1
        %v444 = vrot.slane %v278, 1
        %v445 = vsel %vm430, %v443, %v444
        %v446 = vrot.slane %v279, 1
        %v447 = vrot.slane %v280, 1
        %v448 = vsel %vm430, %v446, %v447
        %v449 = vrot.slane %v281, 1
        %v450 = vrot.slane %v282, 1
        %v451 = vsel %vm430, %v449, %v450
        %v452 = vrot.slane %v283, 1
        %v453 = vrot.slane %v284, 1
        %v454 = vsel %vm430, %v452, %v453
        %v455 = vrot.slane %v285, 1
        %v456 = vrot.slane %v286, 1
        %v457 = vsel %vm430, %v455, %v456
        %v458 = vrot.slane %v287, 1
        %v459 = vrot.slane %v288, 1
        %v460 = vsel %vm430, %v458, %v459
        %v461 = vrot.slane %v289, 1
        %v462 = vrot.slane %v290, 1
        %v463 = vsel %vm430, %v461, %v462
        %v464 = vrot.slane %v291, 1
        %v465 = vrot.slane %v292, 1
        %v466 = vsel %vm430, %v464, %v465
        %v467 = vrot.slane %v293, 1
        %v468 = vrot.slane %v294, 1
        %v469 = vsel %vm430, %v467, %v468
        %v470 = vrot.slane %v295, 1
        %v471 = vrot.slane %v296, 1
        %v472 = vsel %vm430, %v470, %v471
        %v473 = vrot.slane %v297, 1
        %v474 = vrot.slane %v298, 1
        %v475 = vsel %vm430, %v473, %v474
        %v476 = vrot.slane %v299, 1
        %v477 = vrot.slane %v300, 1
        %v478 = vsel %vm430, %v476, %v477
        %v511 = vsel %vm430, %v432, 0.0
        %v512 = vsel %vm430, %v435, 0.0
        %v513 = vsel %vm430, %v438, 0.0
        %v514 = vsel %vm430, %v441, 0.0
        %v515 = vsel %vm430, %v444, 0.0
        %v516 = vsel %vm430, %v447, 0.0
        %v517 = vsel %vm430, %v450, 0.0
        %v518 = vsel %vm430, %v453, 0.0
        %v519 = vsel %vm430, %v456, 0.0
        %v520 = vsel %vm430, %v459, 0.0
        %v521 = vsel %vm430, %v462, 0.0
        %v522 = vsel %vm430, %v465, 0.0
        %v523 = vsel %vm430, %v468, 0.0
        %v524 = vsel %vm430, %v471, 0.0
        %v525 = vsel %vm430, %v474, 0.0
        %v526 = vsel %vm430, %v477, 0.0
        %v527 = vld [vmem:[#allocation5] sm:$0xff]
        %v528 = vld [vmem:[#allocation5 + $0x8] sm:$0xff]
        %v529 = vld [vmem:[#allocation5 + $0x10] sm:$0xff]
        %v530 = vld [vmem:[#allocation5 + $0x18] sm:$0xff]
        %v531 = vld [vmem:[#allocation5 + $0x20] sm:$0xff]
        %v532 = vld [vmem:[#allocation5 + $0x28] sm:$0xff]
        %v533 = vld [vmem:[#allocation5 + $0x30] sm:$0xff]
        %v534 = vld [vmem:[#allocation5 + $0x38] sm:$0xff]
        %v535 = vld [vmem:[#allocation5 + $0x40] sm:$0xff]
        %v536 = vld [vmem:[#allocation5 + $0x48] sm:$0xff]
        %v537 = vld [vmem:[#allocation5 + $0x50] sm:$0xff]
        %v538 = vld [vmem:[#allocation5 + $0x58] sm:$0xff]
        %v539 = vld [vmem:[#allocation5 + $0x60] sm:$0xff]
        %v540 = vld [vmem:[#allocation5 + $0x68] sm:$0xff]
        %v541 = vld [vmem:[#allocation5 + $0x70] sm:$0xff]
        %v542 = vld [vmem:[#allocation5 + $0x78] sm:$0xff]
        %v543 = vld [vmem:[#allocation5 + $0x80] sm:$0xff]
        %v544 = vld [vmem:[#allocation5 + $0x88] sm:$0xff]
        %v545 = vld [vmem:[#allocation5 + $0x90] sm:$0xff]
        %v546 = vld [vmem:[#allocation5 + $0x98] sm:$0xff]
        %v547 = vld [vmem:[#allocation5 + $0xa0] sm:$0xff]
        %v548 = vld [vmem:[#allocation5 + $0xa8] sm:$0xff]
        %v549 = vld [vmem:[#allocation5 + $0xb0] sm:$0xff]
        %v550 = vld [vmem:[#allocation5 + $0xb8] sm:$0xff]
        %v551 = vld [vmem:[#allocation5 + $0xc0] sm:$0xff]
        %v552 = vld [vmem:[#allocation5 + $0xc8] sm:$0xff]
        %v553 = vld [vmem:[#allocation5 + $0xd0] sm:$0xff]
        %v554 = vld [vmem:[#allocation5 + $0xd8] sm:$0xff]
        %v555 = vld [vmem:[#allocation5 + $0xe0] sm:$0xff]
        %v556 = vld [vmem:[#allocation5 + $0xe8] sm:$0xff]
        %v557 = vld [vmem:[#allocation5 + $0xf0] sm:$0xff]
        %v558 = vld [vmem:[#allocation5 + $0xf8] sm:$0xff]
        %v559 = vld [vmem:[#allocation5 + $0x100] sm:$0xff]
        %v560 = vld [vmem:[#allocation5 + $0x108] sm:$0xff]
        %v561 = vld [vmem:[#allocation5 + $0x110] sm:$0xff]
        %v562 = vld [vmem:[#allocation5 + $0x118] sm:$0xff]
        %v563 = vld [vmem:[#allocation5 + $0x120] sm:$0xff]
        %v564 = vld [vmem:[#allocation5 + $0x128] sm:$0xff]
        %v565 = vld [vmem:[#allocation5 + $0x130] sm:$0xff]
        %v566 = vld [vmem:[#allocation5 + $0x138] sm:$0xff]
        %v567 = vld [vmem:[#allocation5 + $0x140] sm:$0xff]
        %v568 = vld [vmem:[#allocation5 + $0x148] sm:$0xff]
        %v569 = vld [vmem:[#allocation5 + $0x150] sm:$0xff]
        %v570 = vld [vmem:[#allocation5 + $0x158] sm:$0xff]
        %v571 = vld [vmem:[#allocation5 + $0x160] sm:$0xff]
        %v572 = vld [vmem:[#allocation5 + $0x168] sm:$0xff]
        %v573 = vld [vmem:[#allocation5 + $0x170] sm:$0xff]
        %v574 = vld [vmem:[#allocation5 + $0x178] sm:$0xff]
        %v575 = vld [vmem:[#allocation5 + $0x180] sm:$0xff]
        %v576 = vld [vmem:[#allocation5 + $0x188] sm:$0xff]
        %v577 = vld [vmem:[#allocation5 + $0x190] sm:$0xff]
        %v578 = vld [vmem:[#allocation5 + $0x198] sm:$0xff]
        %v579 = vld [vmem:[#allocation5 + $0x1a0] sm:$0xff]
        %v580 = vld [vmem:[#allocation5 + $0x1a8] sm:$0xff]
        %v581 = vld [vmem:[#allocation5 + $0x1b0] sm:$0xff]
        %v582 = vld [vmem:[#allocation5 + $0x1b8] sm:$0xff]
        %v583 = vld [vmem:[#allocation5 + $0x1c0] sm:$0xff]
        %v584 = vld [vmem:[#allocation5 + $0x1c8] sm:$0xff]
        %v585 = vld [vmem:[#allocation5 + $0x1d0] sm:$0xff]
        %v586 = vld [vmem:[#allocation5 + $0x1d8] sm:$0xff]
        %v587 = vld [vmem:[#allocation5 + $0x1e0] sm:$0xff]
        %v588 = vld [vmem:[#allocation5 + $0x1e8] sm:$0xff]
        %v589 = vld [vmem:[#allocation5 + $0x1f0] sm:$0xff]
        %v590 = vld [vmem:[#allocation5 + $0x1f8] sm:$0xff]
        %v591 = vld [vmem:[#allocation5 + $0x200] sm:$0xff]
        %v592 = vld [vmem:[#allocation5 + $0x208] sm:$0xff]
        %v593 = vld [vmem:[#allocation5 + $0x210] sm:$0xff]
        %v594 = vld [vmem:[#allocation5 + $0x218] sm:$0xff]
        %v595 = vld [vmem:[#allocation5 + $0x220] sm:$0xff]
        %v596 = vld [vmem:[#allocation5 + $0x228] sm:$0xff]
        %v597 = vld [vmem:[#allocation5 + $0x230] sm:$0xff]
        %v598 = vld [vmem:[#allocation5 + $0x238] sm:$0xff]
        %v599 = vld [vmem:[#allocation5 + $0x240] sm:$0xff]
        %v600 = vld [vmem:[#allocation5 + $0x248] sm:$0xff]
        %v601 = vld [vmem:[#allocation5 + $0x250] sm:$0xff]
        %v602 = vld [vmem:[#allocation5 + $0x258] sm:$0xff]
        %v603 = vld [vmem:[#allocation5 + $0x260] sm:$0xff]
        %v604 = vld [vmem:[#allocation5 + $0x268] sm:$0xff]
        %v605 = vld [vmem:[#allocation5 + $0x270] sm:$0xff]
        %v606 = vld [vmem:[#allocation5 + $0x278] sm:$0xff]
        %v607 = vld [vmem:[#allocation5 + $0x280] sm:$0xff]
        %v608 = vld [vmem:[#allocation5 + $0x288] sm:$0xff]
        %v609 = vld [vmem:[#allocation5 + $0x290] sm:$0xff]
        %v610 = vld [vmem:[#allocation5 + $0x298] sm:$0xff]
        %v611 = vld [vmem:[#allocation5 + $0x2a0] sm:$0xff]
        %v612 = vld [vmem:[#allocation5 + $0x2a8] sm:$0xff]
        %v613 = vld [vmem:[#allocation5 + $0x2b0] sm:$0xff]
        %v614 = vld [vmem:[#allocation5 + $0x2b8] sm:$0xff]
        %v615 = vld [vmem:[#allocation5 + $0x2c0] sm:$0xff]
        %v616 = vld [vmem:[#allocation5 + $0x2c8] sm:$0xff]
        %v617 = vld [vmem:[#allocation5 + $0x2d0] sm:$0xff]
        %v618 = vld [vmem:[#allocation5 + $0x2d8] sm:$0xff]
        %v619 = vld [vmem:[#allocation5 + $0x2e0] sm:$0xff]
        %v620 = vld [vmem:[#allocation5 + $0x2e8] sm:$0xff]
        %v621 = vld [vmem:[#allocation5 + $0x2f0] sm:$0xff]
        %v622 = vld [vmem:[#allocation5 + $0x2f8] sm:$0xff]
        %v623 = vld [vmem:[#allocation5 + $0x300] sm:$0xff]
        %v624 = vld [vmem:[#allocation5 + $0x308] sm:$0xff]
        %v625 = vld [vmem:[#allocation5 + $0x310] sm:$0xff]
        %v626 = vld [vmem:[#allocation5 + $0x318] sm:$0xff]
        %v627 = vld [vmem:[#allocation5 + $0x320] sm:$0xff]
        %v628 = vld [vmem:[#allocation5 + $0x328] sm:$0xff]
        %v629 = vld [vmem:[#allocation5 + $0x330] sm:$0xff]
        %v630 = vld [vmem:[#allocation5 + $0x338] sm:$0xff]
        %v631 = vld [vmem:[#allocation5 + $0x340] sm:$0xff]
        %v632 = vld [vmem:[#allocation5 + $0x348] sm:$0xff]
        %v633 = vld [vmem:[#allocation5 + $0x350] sm:$0xff]
        %v634 = vld [vmem:[#allocation5 + $0x358] sm:$0xff]
        %v635 = vld [vmem:[#allocation5 + $0x360] sm:$0xff]
        %v636 = vld [vmem:[#allocation5 + $0x368] sm:$0xff]
        %v637 = vld [vmem:[#allocation5 + $0x370] sm:$0xff]
        %v638 = vld [vmem:[#allocation5 + $0x378] sm:$0xff]
        %v639 = vld [vmem:[#allocation5 + $0x380] sm:$0xff]
        %v640 = vld [vmem:[#allocation5 + $0x388] sm:$0xff]
        %v641 = vld [vmem:[#allocation5 + $0x390] sm:$0xff]
        %v642 = vld [vmem:[#allocation5 + $0x398] sm:$0xff]
        %v643 = vld [vmem:[#allocation5 + $0x3a0] sm:$0xff]
        %v644 = vld [vmem:[#allocation5 + $0x3a8] sm:$0xff]
        %v645 = vld [vmem:[#allocation5 + $0x3b0] sm:$0xff]
        %v646 = vld [vmem:[#allocation5 + $0x3b8] sm:$0xff]
        %v647 = vld [vmem:[#allocation5 + $0x3c0] sm:$0xff]
        %v648 = vld [vmem:[#allocation5 + $0x3c8] sm:$0xff]
        %v649 = vld [vmem:[#allocation5 + $0x3d0] sm:$0xff]
        %v650 = vld [vmem:[#allocation5 + $0x3d8] sm:$0xff]
        %v651 = vld [vmem:[#allocation5 + $0x3e0] sm:$0xff]
        %v652 = vld [vmem:[#allocation5 + $0x3e8] sm:$0xff]
        %v653 = vld [vmem:[#allocation5 + $0x3f0] sm:$0xff]
        %v654 = vld [vmem:[#allocation5 + $0x3f8] sm:$0xff]
        %v655 = vld [vmem:[#allocation5 + $0x400] sm:$0xff]
        %v656 = vld [vmem:[#allocation5 + $0x408] sm:$0xff]
        %v657 = vld [vmem:[#allocation5 + $0x410] sm:$0xff]
        %v658 = vld [vmem:[#allocation5 + $0x418] sm:$0xff]
        %v659 = vld [vmem:[#allocation5 + $0x420] sm:$0xff]
        %v660 = vld [vmem:[#allocation5 + $0x428] sm:$0xff]
        %v661 = vld [vmem:[#allocation5 + $0x430] sm:$0xff]
        %v662 = vld [vmem:[#allocation5 + $0x438] sm:$0xff]
        %v663 = vld [vmem:[#allocation5 + $0x440] sm:$0xff]
        %v664 = vld [vmem:[#allocation5 + $0x448] sm:$0xff]
        %v665 = vld [vmem:[#allocation5 + $0x450] sm:$0xff]
        %v666 = vld [vmem:[#allocation5 + $0x458] sm:$0xff]
        %v667 = vld [vmem:[#allocation5 + $0x460] sm:$0xff]
        %v668 = vld [vmem:[#allocation5 + $0x468] sm:$0xff]
        %v669 = vld [vmem:[#allocation5 + $0x470] sm:$0xff]
        %v670 = vld [vmem:[#allocation5 + $0x478] sm:$0xff]
        %671 = vmatprep.subr.mxu0 0.0
        %672 = vmatpush1.msra.mxu0 %v527
        %673 = vmatprep.subr.mxu0 0.0
        %674 = vmatpush1.msra.mxu0 %v528
        %675 = vmatprep.subr.mxu0 0.0
        %676 = vmatpush1.msra.mxu0 %v529
        %677 = vmatprep.subr.mxu0 0.0
        %678 = vmatpush1.msra.mxu0 %v530
        %679 = vmatprep.subr.mxu0 0.0
        %680 = vmatpush1.msra.mxu0 %v531
        %681 = vmatprep.subr.mxu0 0.0
        %682 = vmatpush1.msra.mxu0 %v532
        %683 = vmatprep.subr.mxu0 0.0
        %684 = vmatpush1.msra.mxu0 %v533
        %685 = vmatprep.subr.mxu0 0.0
        %686 = vmatpush1.msra.mxu0 %v534
        %687 = vmatprep.subr.mxu0 0.0
        %688 = vmatpush1.msra.mxu0 %v535
        %689 = vmatprep.subr.mxu0 0.0
        %690 = vmatpush1.msra.mxu0 %v536
        %691 = vmatprep.subr.mxu0 0.0
        %692 = vmatpush1.msra.mxu0 %v537
        %693 = vmatprep.subr.mxu0 0.0
        %694 = vmatpush1.msra.mxu0 %v538
        %695 = vmatprep.subr.mxu0 0.0
        %696 = vmatpush1.msra.mxu0 %v539
        %697 = vmatprep.subr.mxu0 0.0
        %698 = vmatpush1.msra.mxu0 %v540
        %699 = vmatprep.subr.mxu0 0.0
        %700 = vmatpush1.msra.mxu0 %v541
        %701 = vmatprep.subr.mxu0 0.0
        %702 = vmatpush1.msra.mxu0 %v542
        %703 = vmatprep.subr.mxu0 0.0
        %704 = vmatpush1.msra.mxu0 %v543
        %705 = vmatprep.subr.mxu0 0.0
        %706 = vmatpush1.msra.mxu0 %v544
        %707 = vmatprep.subr.mxu0 0.0
        %708 = vmatpush1.msra.mxu0 %v545
        %709 = vmatprep.subr.mxu0 0.0
        %710 = vmatpush1.msra.mxu0 %v546
        %711 = vmatprep.subr.mxu0 0.0
        %712 = vmatpush1.msra.mxu0 %v547
        %713 = vmatprep.subr.mxu0 0.0
        %714 = vmatpush1.msra.mxu0 %v548
        %715 = vmatprep.subr.mxu0 0.0
        %716 = vmatpush1.msra.mxu0 %v549
        %717 = vmatprep.subr.mxu0 0.0
        %718 = vmatpush1.msra.mxu0 %v550
        %719 = vmatprep.subr.mxu0 0.0
        %720 = vmatpush1.msra.mxu0 %v551
        %721 = vmatprep.subr.mxu0 0.0
        %722 = vmatpush1.msra.mxu0 %v552
        %723 = vmatprep.subr.mxu0 0.0
        %724 = vmatpush1.msra.mxu0 %v553
        %725 = vmatprep.subr.mxu0 0.0
        %726 = vmatpush1.msra.mxu0 %v554
        %727 = vmatprep.subr.mxu0 0.0
        %728 = vmatpush1.msra.mxu0 %v555
        %729 = vmatprep.subr.mxu0 0.0
        %730 = vmatpush1.msra.mxu0 %v556
        %731 = vmatprep.subr.mxu0 0.0
        %732 = vmatpush1.msra.mxu0 %v557
        %733 = vmatprep.subr.mxu0 0.0
        %734 = vmatpush1.msra.mxu0 %v558
        %735 = vmatprep.mubr.f32.mxu0 0.0
        %736 = vmatmul.mubr.f32.gmra.mrb[0].mxu0 0.0
        %v737 = vpop.f32.mrb[0].mxu0
        %v738 = vadd.f32 0.0, %v737
        %v739 = vpop.f32.mrb[0].mxu0
        %740 = vmatprep.mubr.f32.mxu0 0.0
        %741 = vmatmul.mubr.f32.gmra.mrb[0].mxu0 0.0
        %v742 = vpop.f32.mrb[0].mxu0
        %v743 = vadd.f32 0.0, %v742
        %v744 = vpop.f32.mrb[0].mxu0
        %745 = vmatprep.mubr.f32.mxu0 %v269
        %746 = vmatmul.mubr.f32.gmra.mrb[0].mxu0 %v414
        %v747 = vpop.f32.mrb[0].mxu0
        %v748 = vadd.f32 0.0, %v747
        %v749 = vpop.f32.mrb[0].mxu0
        %750 = vmatprep.mubr.f32.mxu0 %v270
        %751 = vmatmul.mubr.f32.gmra.mrb[0].mxu0 %v336
        %v752 = vpop.f32.mrb[0].mxu0
        %v753 = vadd.f32 0.0, %v752
        %v754 = vpop.f32.mrb[0].mxu0
        %755 = vmatprep.mubr.f32.mxu0 %v271
        %756 = vmatmul.mubr.f32.gmra.mrb[0].mxu0 %v415
        %v757 = vpop.f32.mrb[0].mxu0
        %v758 = vadd.f32 0.0, %v757
        %v759 = vpop.f32.mrb[0].mxu0
        %760 = vmatprep.mubr.f32.mxu0 %v272
        %761 = vmatmul.mubr.f32.gmra.mrb[0].mxu0 %v339
        %v762 = vpop.f32.mrb[0].mxu0
        %v763 = vadd.f32 0.0, %v762
        %v764 = vpop.f32.mrb[0].mxu0
        %765 = vmatprep.mubr.f32.mxu0 %v273
        %766 = vmatmul.mubr.f32.gmra.mrb[0].mxu0 %v416
        %v767 = vpop.f32.mrb[0].mxu0
        %v768 = vadd.f32 0.0, %v767
        %v769 = vpop.f32.mrb[0].mxu0
        %770 = vmatprep.mubr.f32.mxu0 %v274
        %771 = vmatmul.mubr.f32.gmra.mrb[0].mxu0 %v342
        %v772 = vpop.f32.mrb[0].mxu0
        %v773 = vadd.f32 0.0, %v772
        %v774 = vpop.f32.mrb[0].mxu0
        %775 = vmatprep.mubr.f32.mxu0 %v275
        %776 = vmatmul.mubr.f32.gmra.mrb[0].mxu0 %v417
        %v777 = vpop.f32.mrb[0].mxu0
        %v778 = vadd.f32 0.0, %v777
        %v779 = vpop.f32.mrb[0].mxu0
        %780 = vmatprep.mubr.f32.mxu0 %v276
        %781 = vmatmul.mubr.f32.gmra.mrb[0].mxu0 %v345
        %v782 = vpop.f32.mrb[0].mxu0
        %v783 = vadd.f32 0.0, %v782
        %v784 = vpop.f32.mrb[0].mxu0
        %785 = vmatprep.mubr.f32.mxu0 %v277
        %786 = vmatmul.mubr.f32.gmra.mrb[0].mxu0 %v418
        %v787 = vpop.f32.mrb[0].mxu0
        %v788 = vadd.f32 0.0, %v787
        %v789 = vpop.f32.mrb[0].mxu0
        %790 = vmatprep.mubr.f32.mxu0 %v278
        %791 = vmatmul.mubr.f32.gmra.mrb[0].mxu0 %v348
        %v792 = vpop.f32.mrb[0].mxu0
        %v793 = vadd.f32 0.0, %v792
        %v794 = vpop.f32.mrb[0].mxu0
        %795 = vmatprep.mubr.f32.mxu0 %v279
        %796 = vmatmul.mubr.f32.gmra.mrb[0].mxu0 %v419
        %v797 = vpop.f32.mrb[0].mxu0
        %v798 = vadd.f32 0.0, %v797
        %v799 = vpop.f32.mrb[0].mxu0
        %800 = vmatprep.mubr.f32.mxu0 %v280
        %801 = vmatmul.mubr.f32.gmra.mrb[0].mxu0 %v351
        %v802 = vpop.f32.mrb[0].mxu0
        %v803 = vadd.f32 0.0, %v802
        %v804 = vpop.f32.mrb[0].mxu0
        %805 = vmatprep.mubr.f32.mxu0 %v281
        %806 = vmatmul.mubr.f32.gmra.mrb[0].mxu0 %v420
        %v807 = vpop.f32.mrb[0].mxu0
        %v808 = vadd.f32 0.0, %v807
        %v809 = vpop.f32.mrb[0].mxu0
        %810 = vmatprep.mubr.f32.mxu0 %v282
        %811 = vmatmul.mubr.f32.gmra.mrb[0].mxu0 %v354
        %v812 = vpop.f32.mrb[0].mxu0
        %v813 = vadd.f32 0.0, %v812
        %v814 = vpop.f32.mrb[0].mxu0
        %815 = vmatprep.mubr.f32.mxu0 %v283
        %816 = vmatmul.mubr.f32.gmra.mrb[0].mxu0 %v421
        %v817 = vpop.f32.mrb[0].mxu0
        %v818 = vadd.f32 0.0, %v817
        %v819 = vpop.f32.mrb[0].mxu0
        %820 = vmatprep.mubr.f32.mxu0 %v284
        %821 = vmatmul.mubr.f32.gmra.mrb[0].mxu0 %v357
        %v822 = vpop.f32.mrb[0].mxu0
        %v823 = vadd.f32 0.0, %v822
        %v824 = vpop.f32.mrb[0].mxu0
        %825 = vmatprep.mubr.f32.mxu0 %v285
        %826 = vmatmul.mubr.f32.gmra.mrb[0].mxu0 %v422
        %v827 = vpop.f32.mrb[0].mxu0
        %v828 = vadd.f32 0.0, %v827
        %v829 = vpop.f32.mrb[0].mxu0
        %830 = vmatprep.mubr.f32.mxu0 %v286
        %831 = vmatmul.mubr.f32.gmra.mrb[0].mxu0 %v360
        %v832 = vpop.f32.mrb[0].mxu0
        %v833 = vadd.f32 0.0, %v832
        %v834 = vpop.f32.mrb[0].mxu0
        %835 = vmatprep.mubr.f32.mxu0 %v287
        %836 = vmatmul.mubr.f32.gmra.mrb[0].mxu0 %v423
        %v837 = vpop.f32.mrb[0].mxu0
        %v838 = vadd.f32 0.0, %v837
        %v839 = vpop.f32.mrb[0].mxu0
        %840 = vmatprep.mubr.f32.mxu0 %v288
        %841 = vmatmul.mubr.f32.gmra.mrb[0].mxu0 %v363
        %v842 = vpop.f32.mrb[0].mxu0
        %v843 = vadd.f32 0.0, %v842
        %v844 = vpop.f32.mrb[0].mxu0
        %845 = vmatprep.mubr.f32.mxu0 %v289
        %846 = vmatmul.mubr.f32.gmra.mrb[0].mxu0 %v424
        %v847 = vpop.f32.mrb[0].mxu0
        %v848 = vadd.f32 0.0, %v847
        %v849 = vpop.f32.mrb[0].mxu0
        %850 = vmatprep.mubr.f32.mxu0 %v290
        %851 = vmatmul.mubr.f32.gmra.mrb[0].mxu0 %v366
        %v852 = vpop.f32.mrb[0].mxu0
        %v853 = vadd.f32 0.0, %v852
        %v854 = vpop.f32.mrb[0].mxu0
        %855 = vmatprep.mubr.f32.mxu0 %v291
        %856 = vmatmul.mubr.f32.gmra.mrb[0].mxu0 %v425
        %v857 = vpop.f32.mrb[0].mxu0
        %v858 = vadd.f32 0.0, %v857
        %v859 = vpop.f32.mrb[0].mxu0
        %860 = vmatprep.mubr.f32.mxu0 %v292
        %861 = vmatmul.mubr.f32.gmra.mrb[0].mxu0 %v369
        %v862 = vpop.f32.mrb[0].mxu0
        %v863 = vadd.f32 0.0, %v862
        %v864 = vpop.f32.mrb[0].mxu0
        %865 = vmatprep.mubr.f32.mxu0 %v293
        %866 = vmatmul.mubr.f32.gmra.mrb[0].mxu0 %v426
        %v867 = vpop.f32.mrb[0].mxu0
        %v868 = vadd.f32 0.0, %v867
        %v869 = vpop.f32.mrb[0].mxu0
        %870 = vmatprep.mubr.f32.mxu0 %v294
        %871 = vmatmul.mubr.f32.gmra.mrb[0].mxu0 %v372
        %v872 = vpop.f32.mrb[0].mxu0
        %v873 = vadd.f32 0.0, %v872
        %v874 = vpop.f32.mrb[0].mxu0
        %875 = vmatprep.mubr.f32.mxu0 %v295
        %876 = vmatmul.mubr.f32.gmra.mrb[0].mxu0 %v427
        %v877 = vpop.f32.mrb[0].mxu0
        %v878 = vadd.f32 0.0, %v877
        %v879 = vpop.f32.mrb[0].mxu0
        %880 = vmatprep.mubr.f32.mxu0 %v296
        %881 = vmatmul.mubr.f32.gmra.mrb[0].mxu0 %v375
        %v882 = vpop.f32.mrb[0].mxu0
        %v883 = vadd.f32 0.0, %v882
        %v884 = vpop.f32.mrb[0].mxu0
        %885 = vmatprep.mubr.f32.mxu0 %v297
        %886 = vmatmul.mubr.f32.gmra.mrb[0].mxu0 %v428
        %v887 = vpop.f32.mrb[0].mxu0
        %v888 = vadd.f32 0.0, %v887
        %v889 = vpop.f32.mrb[0].mxu0
        %890 = vmatprep.mubr.f32.mxu0 %v298
        %891 = vmatmul.mubr.f32.gmra.mrb[0].mxu0 %v378
        %v892 = vpop.f32.mrb[0].mxu0
        %v893 = vadd.f32 0.0, %v892
        %v894 = vpop.f32.mrb[0].mxu0
        %895 = vdwg.mxu0
        %896 = vmatprep.subr.mxu0 0.0
        %897 = vmatpush1.msra.mxu0 %v559
        %898 = vmatprep.subr.mxu0 0.0
        %899 = vmatpush1.msra.mxu0 %v560
        %900 = vmatprep.subr.mxu0 0.0
        %901 = vmatpush1.msra.mxu0 %v561
        %902 = vmatprep.subr.mxu0 0.0
        %903 = vmatpush1.msra.mxu0 %v562
        %904 = vmatprep.subr.mxu0 0.0
        %905 = vmatpush1.msra.mxu0 %v563
        %906 = vmatprep.subr.mxu0 0.0
        %907 = vmatpush1.msra.mxu0 %v564
        %908 = vmatprep.subr.mxu0 0.0
        %909 = vmatpush1.msra.mxu0 %v565
        %910 = vmatprep.subr.mxu0 0.0
        %911 = vmatpush1.msra.mxu0 %v566
        %912 = vmatprep.subr.mxu0 0.0
        %913 = vmatpush1.msra.mxu0 %v567
        %914 = vmatprep.subr.mxu0 0.0
        %915 = vmatpush1.msra.mxu0 %v568
        %916 = vmatprep.subr.mxu0 0.0
        %917 = vmatpush1.msra.mxu0 %v569
        %918 = vmatprep.subr.mxu0 0.0
        %919 = vmatpush1.msra.mxu0 %v570
        %920 = vmatprep.subr.mxu0 0.0
        %921 = vmatpush1.msra.mxu0 %v571
        %922 = vmatprep.subr.mxu0 0.0
        %923 = vmatpush1.msra.mxu0 %v572
        %924 = vmatprep.subr.mxu0 0.0
        %925 = vmatpush1.msra.mxu0 %v573
        %926 = vmatprep.subr.mxu0 0.0
        %927 = vmatpush1.msra.mxu0 %v574
        %928 = vmatprep.subr.mxu0 0.0
        %929 = vmatpush1.msra.mxu0 %v575
        %930 = vmatprep.subr.mxu0 0.0
        %931 = vmatpush1.msra.mxu0 %v576
        %932 = vmatprep.subr.mxu0 0.0
        %933 = vmatpush1.msra.mxu0 %v577
        %934 = vmatprep.subr.mxu0 0.0
        %935 = vmatpush1.msra.mxu0 %v578
        %936 = vmatprep.subr.mxu0 0.0
        %937 = vmatpush1.msra.mxu0 %v579
        %938 = vmatprep.subr.mxu0 0.0
        %939 = vmatpush1.msra.mxu0 %v580
        %940 = vmatprep.subr.mxu0 0.0
        %941 = vmatpush1.msra.mxu0 %v581
        %942 = vmatprep.subr.mxu0 0.0
        %943 = vmatpush1.msra.mxu0 %v582
        %944 = vmatprep.subr.mxu0 0.0
        %945 = vmatpush1.msra.mxu0 %v583
        %946 = vmatprep.subr.mxu0 0.0
        %947 = vmatpush1.msra.mxu0 %v584
        %948 = vmatprep.subr.mxu0 0.0
        %949 = vmatpush1.msra.mxu0 %v585
        %950 = vmatprep.subr.mxu0 0.0
        %951 = vmatpush1.msra.mxu0 %v586
        %952 = vmatprep.subr.mxu0 0.0
        %953 = vmatpush1.msra.mxu0 %v587
        %954 = vmatprep.subr.mxu0 0.0
        %955 = vmatpush1.msra.mxu0 %v588
        %956 = vmatprep.subr.mxu0 0.0
        %957 = vmatpush1.msra.mxu0 %v589
        %958 = vmatprep.subr.mxu0 0.0
        %959 = vmatpush1.msra.mxu0 %v590
        %960 = vmatprep.mubr.f32.mxu0 %v414
        %961 = vmatmul.mubr.f32.gmra.mrb[0].mxu0 0.0
        %v962 = vpop.f32.mrb[0].mxu0
        %v963 = vadd.f32 %v738, %v962
        %v964 = vpop.f32.mrb[0].mxu0
        %965 = vmatprep.mubr.f32.mxu0 %v336
        %966 = vmatmul.mubr.f32.gmra.mrb[0].mxu0 0.0
        %v967 = vpop.f32.mrb[0].mxu0
        %v968 = vadd.f32 %v743, %v967
        %v969 = vpop.f32.mrb[0].mxu0
        %970 = vmatprep.mubr.f32.mxu0 %v415
        %971 = vmatmul.mubr.f32.gmra.mrb[0].mxu0 %v433
        %v972 = vpop.f32.mrb[0].mxu0
        %v973 = vadd.f32 %v748, %v972
        %v974 = vpop.f32.mrb[0].mxu0
        %975 = vmatprep.mubr.f32.mxu0 %v339
        %976 = vmatmul.mubr.f32.gmra.mrb[0].mxu0 %v511
        %v977 = vpop.f32.mrb[0].mxu0
        %v978 = vadd.f32 %v753, %v977
        %v979 = vpop.f32.mrb[0].mxu0
        %980 = vmatprep.mubr.f32.mxu0 %v416
        %981 = vmatmul.mubr.f32.gmra.mrb[0].mxu0 %v436
        %v982 = vpop.f32.mrb[0].mxu0
        %v983 = vadd.f32 %v758, %v982
        %v984 = vpop.f32.mrb[0].mxu0
        %985 = vmatprep.mubr.f32.mxu0 %v342
        %986 = vmatmul.mubr.f32.gmra.mrb[0].mxu0 %v512
        %v987 = vpop.f32.mrb[0].mxu0
        %v988 = vadd.f32 %v763, %v987
        %v989 = vpop.f32.mrb[0].mxu0
        %990 = vmatprep.mubr.f32.mxu0 %v417
        %991 = vmatmul.mubr.f32.gmra.mrb[0].mxu0 %v439
        %v992 = vpop.f32.mrb[0].mxu0
        %v993 = vadd.f32 %v768, %v992
        %v994 = vpop.f32.mrb[0].mxu0
        %995 = vmatprep.mubr.f32.mxu0 %v345
        %996 = vmatmul.mubr.f32.gmra.mrb[0].mxu0 %v513
        %v997 = vpop.f32.mrb[0].mxu0
        %v998 = vadd.f32 %v773, %v997
        %v999 = vpop.f32.mrb[0].mxu0
        %1000 = vmatprep.mubr.f32.mxu0 %v418
        %1001 = vmatmul.mubr.f32.gmra.mrb[0].mxu0 %v442
        %v1002 = vpop.f32.mrb[0].mxu0
        %v1003 = vadd.f32 %v778, %v1002
        %v1004 = vpop.f32.mrb[0].mxu0
        %1005 = vmatprep.mubr.f32.mxu0 %v348
        %1006 = vmatmul.mubr.f32.gmra.mrb[0].mxu0 %v514
        %v1007 = vpop.f32.mrb[0].mxu0
        %v1008 = vadd.f32 %v783, %v1007
        %v1009 = vpop.f32.mrb[0].mxu0
        %1010 = vmatprep.mubr.f32.mxu0 %v419
        %1011 = vmatmul.mubr.f32.gmra.mrb[0].mxu0 %v445
        %v1012 = vpop.f32.mrb[0].mxu0
        %v1013 = vadd.f32 %v788, %v1012
        %v1014 = vpop.f32.mrb[0].mxu0
        %1015 = vmatprep.mubr.f32.mxu0 %v351
        %1016 = vmatmul.mubr.f32.gmra.mrb[0].mxu0 %v515
        %v1017 = vpop.f32.mrb[0].mxu0
        %v1018 = vadd.f32 %v793, %v1017
        %v1019 = vpop.f32.mrb[0].mxu0
        %1020 = vmatprep.mubr.f32.mxu0 %v420
        %1021 = vmatmul.mubr.f32.gmra.mrb[0].mxu0 %v448
        %v1022 = vpop.f32.mrb[0].mxu0
        %v1023 = vadd.f32 %v798, %v1022
        %v1024 = vpop.f32.mrb[0].mxu0
        %1025 = vmatprep.mubr.f32.mxu0 %v354
        %1026 = vmatmul.mubr.f32.gmra.mrb[0].mxu0 %v516
        %v1027 = vpop.f32.mrb[0].mxu0
        %v1028 = vadd.f32 %v803, %v1027
        %v1029 = vpop.f32.mrb[0].mxu0
        %1030 = vmatprep.mubr.f32.mxu0 %v421
        %1031 = vmatmul.mubr.f32.gmra.mrb[0].mxu0 %v451
        %v1032 = vpop.f32.mrb[0].mxu0
        %v1033 = vadd.f32 %v808, %v1032
        %v1034 = vpop.f32.mrb[0].mxu0
        %1035 = vmatprep.mubr.f32.mxu0 %v357
        %1036 = vmatmul.mubr.f32.gmra.mrb[0].mxu0 %v517
        %v1037 = vpop.f32.mrb[0].mxu0
        %v1038 = vadd.f32 %v813, %v1037
        %v1039 = vpop.f32.mrb[0].mxu0
        %1040 = vmatprep.mubr.f32.mxu0 %v422
        %1041 = vmatmul.mubr.f32.gmra.mrb[0].mxu0 %v454
        %v1042 = vpop.f32.mrb[0].mxu0
        %v1043 = vadd.f32 %v818, %v1042
        %v1044 = vpop.f32.mrb[0].mxu0
        %1045 = vmatprep.mubr.f32.mxu0 %v360
        %1046 = vmatmul.mubr.f32.gmra.mrb[0].mxu0 %v518
        %v1047 = vpop.f32.mrb[0].mxu0
        %v1048 = vadd.f32 %v823, %v1047
        %v1049 = vpop.f32.mrb[0].mxu0
        %1050 = vmatprep.mubr.f32.mxu0 %v423
        %1051 = vmatmul.mubr.f32.gmra.mrb[0].mxu0 %v457
        %v1052 = vpop.f32.mrb[0].mxu0
        %v1053 = vadd.f32 %v828, %v1052
        %v1054 = vpop.f32.mrb[0].mxu0
        %1055 = vmatprep.mubr.f32.mxu0 %v363
        %1056 = vmatmul.mubr.f32.gmra.mrb[0].mxu0 %v519
        %v1057 = vpop.f32.mrb[0].mxu0
        %v1058 = vadd.f32 %v833, %v1057
        %v1059 = vpop.f32.mrb[0].mxu0
        %1060 = vmatprep.mubr.f32.mxu0 %v424
        %1061 = vmatmul.mubr.f32.gmra.mrb[0].mxu0 %v460
        %v1062 = vpop.f32.mrb[0].mxu0
        %v1063 = vadd.f32 %v838, %v1062
        %v1064 = vpop.f32.mrb[0].mxu0
        %1065 = vmatprep.mubr.f32.mxu0 %v366
        %1066 = vmatmul.mubr.f32.gmra.mrb[0].mxu0 %v520
        %v1067 = vpop.f32.mrb[0].mxu0
        %v1068 = vadd.f32 %v843, %v1067
        %v1069 = vpop.f32.mrb[0].mxu0
        %1070 = vmatprep.mubr.f32.mxu0 %v425
        %1071 = vmatmul.mubr.f32.gmra.mrb[0].mxu0 %v463
        %v1072 = vpop.f32.mrb[0].mxu0
        %v1073 = vadd.f32 %v848, %v1072
        %v1074 = vpop.f32.mrb[0].mxu0
        %1075 = vmatprep.mubr.f32.mxu0 %v369
        %1076 = vmatmul.mubr.f32.gmra.mrb[0].mxu0 %v521
        %v1077 = vpop.f32.mrb[0].mxu0
        %v1078 = vadd.f32 %v853, %v1077
        %v1079 = vpop.f32.mrb[0].mxu0
        %1080 = vmatprep.mubr.f32.mxu0 %v426
        %1081 = vmatmul.mubr.f32.gmra.mrb[0].mxu0 %v466
        %v1082 = vpop.f32.mrb[0].mxu0
        %v1083 = vadd.f32 %v858, %v1082
        %v1084 = vpop.f32.mrb[0].mxu0
        %1085 = vmatprep.mubr.f32.mxu0 %v372
        %1086 = vmatmul.mubr.f32.gmra.mrb[0].mxu0 %v522
        %v1087 = vpop.f32.mrb[0].mxu0
        %v1088 = vadd.f32 %v863, %v1087
        %v1089 = vpop.f32.mrb[0].mxu0
        %1090 = vmatprep.mubr.f32.mxu0 %v427
        %1091 = vmatmul.mubr.f32.gmra.mrb[0].mxu0 %v469
        %v1092 = vpop.f32.mrb[0].mxu0
        %v1093 = vadd.f32 %v868, %v1092
        %v1094 = vpop.f32.mrb[0].mxu0
        %1095 = vmatprep.mubr.f32.mxu0 %v375
        %1096 = vmatmul.mubr.f32.gmra.mrb[0].mxu0 %v523
        %v1097 = vpop.f32.mrb[0].mxu0
        %v1098 = vadd.f32 %v873, %v1097
        %v1099 = vpop.f32.mrb[0].mxu0
        %1100 = vmatprep.mubr.f32.mxu0 %v428
        %1101 = vmatmul.mubr.f32.gmra.mrb[0].mxu0 %v472
        %v1102 = vpop.f32.mrb[0].mxu0
        %v1103 = vadd.f32 %v878, %v1102
        %v1104 = vpop.f32.mrb[0].mxu0
        %1105 = vmatprep.mubr.f32.mxu0 %v378
        %1106 = vmatmul.mubr.f32.gmra.mrb[0].mxu0 %v524
        %v1107 = vpop.f32.mrb[0].mxu0
        %v1108 = vadd.f32 %v883, %v1107
        %v1109 = vpop.f32.mrb[0].mxu0
        %1110 = vmatprep.mubr.f32.mxu0 %v429
        %1111 = vmatmul.mubr.f32.gmra.mrb[0].mxu0 %v475
        %v1112 = vpop.f32.mrb[0].mxu0
        %v1113 = vadd.f32 %v888, %v1112
        %v1114 = vpop.f32.mrb[0].mxu0
        %1115 = vmatprep.mubr.f32.mxu0 %v381
        %1116 = vmatmul.mubr.f32.gmra.mrb[0].mxu0 %v525
        %v1117 = vpop.f32.mrb[0].mxu0
        %v1118 = vadd.f32 %v893, %v1117
        %v1119 = vpop.f32.mrb[0].mxu0
        %1120 = vdwg.mxu0
        %1121 = vmatprep.subr.mxu0 0.0
        %1122 = vmatpush1.msra.mxu0 %v591
        %1123 = vmatprep.subr.mxu0 0.0
        %1124 = vmatpush1.msra.mxu0 %v592
        %1125 = vmatprep.subr.mxu0 0.0
        %1126 = vmatpush1.msra.mxu0 %v593
        %1127 = vmatprep.subr.mxu0 0.0
        %1128 = vmatpush1.msra.mxu0 %v594
        %1129 = vmatprep.subr.mxu0 0.0
        %1130 = vmatpush1.msra.mxu0 %v595
        %1131 = vmatprep.subr.mxu0 0.0
        %1132 = vmatpush1.msra.mxu0 %v596
        %1133 = vmatprep.subr.mxu0 0.0
        %1134 = vmatpush1.msra.mxu0 %v597
        %1135 = vmatprep.subr.mxu0 0.0
        %1136 = vmatpush1.msra.mxu0 %v598
        %1137 = vmatprep.subr.mxu0 0.0
        %1138 = vmatpush1.msra.mxu0 %v599
        %1139 = vmatprep.subr.mxu0 0.0
        %1140 = vmatpush1.msra.mxu0 %v600
        %1141 = vmatprep.subr.mxu0 0.0
        %1142 = vmatpush1.msra.mxu0 %v601
        %1143 = vmatprep.subr.mxu0 0.0
        %1144 = vmatpush1.msra.mxu0 %v602
        %1145 = vmatprep.subr.mxu0 0.0
        %1146 = vmatpush1.msra.mxu0 %v603
        %1147 = vmatprep.subr.mxu0 0.0
        %1148 = vmatpush1.msra.mxu0 %v604
        %1149 = vmatprep.subr.mxu0 0.0
        %1150 = vmatpush1.msra.mxu0 %v605
        %1151 = vmatprep.subr.mxu0 0.0
        %1152 = vmatpush1.msra.mxu0 %v606
        %1153 = vmatprep.subr.mxu0 0.0
        %1154 = vmatpush1.msra.mxu0 %v607
        %1155 = vmatprep.subr.mxu0 0.0
        %1156 = vmatpush1.msra.mxu0 %v608
        %1157 = vmatprep.subr.mxu0 0.0
        %1158 = vmatpush1.msra.mxu0 %v609
        %1159 = vmatprep.subr.mxu0 0.0
        %1160 = vmatpush1.msra.mxu0 %v610
        %1161 = vmatprep.subr.mxu0 0.0
        %1162 = vmatpush1.msra.mxu0 %v611
        %1163 = vmatprep.subr.mxu0 0.0
        %1164 = vmatpush1.msra.mxu0 %v612
        %1165 = vmatprep.subr.mxu0 0.0
        %1166 = vmatpush1.msra.mxu0 %v613
        %1167 = vmatprep.subr.mxu0 0.0
        %1168 = vmatpush1.msra.mxu0 %v614
        %1169 = vmatprep.subr.mxu0 0.0
        %1170 = vmatpush1.msra.mxu0 %v615
        %1171 = vmatprep.subr.mxu0 0.0
        %1172 = vmatpush1.msra.mxu0 %v616
        %1173 = vmatprep.subr.mxu0 0.0
        %1174 = vmatpush1.msra.mxu0 %v617
        %1175 = vmatprep.subr.mxu0 0.0
        %1176 = vmatpush1.msra.mxu0 %v618
        %1177 = vmatprep.subr.mxu0 0.0
        %1178 = vmatpush1.msra.mxu0 %v619
        %1179 = vmatprep.subr.mxu0 0.0
        %1180 = vmatpush1.msra.mxu0 %v620
        %1181 = vmatprep.subr.mxu0 0.0
        %1182 = vmatpush1.msra.mxu0 %v621
        %1183 = vmatprep.subr.mxu0 0.0
        %1184 = vmatpush1.msra.mxu0 %v622
        %1185 = vmatprep.mubr.f32.mxu0 %v433
        %1186 = vmatmul.mubr.f32.gmra.mrb[0].mxu0 %v269
        %v1187 = vpop.f32.mrb[0].mxu0
        %v1188 = vadd.f32 %v963, %v1187
        %v1189 = vpop.f32.mrb[0].mxu0
        %1190 = vmatprep.mubr.f32.mxu0 %v511
        %1191 = vmatmul.mubr.f32.gmra.mrb[0].mxu0 %v270
        %v1192 = vpop.f32.mrb[0].mxu0
        %v1193 = vadd.f32 %v968, %v1192
        %v1194 = vpop.f32.mrb[0].mxu0
        %1195 = vmatprep.mubr.f32.mxu0 %v436
        %1196 = vmatmul.mubr.f32.gmra.mrb[0].mxu0 %v271
        %v1197 = vpop.f32.mrb[0].mxu0
        %v1198 = vadd.f32 %v973, %v1197
        %v1199 = vpop.f32.mrb[0].mxu0
        %1200 = vmatprep.mubr.f32.mxu0 %v512
        %1201 = vmatmul.mubr.f32.gmra.mrb[0].mxu0 %v272
        %v1202 = vpop.f32.mrb[0].mxu0
        %v1203 = vadd.f32 %v978, %v1202
        %v1204 = vpop.f32.mrb[0].mxu0
        %1205 = vmatprep.mubr.f32.mxu0 %v439
        %1206 = vmatmul.mubr.f32.gmra.mrb[0].mxu0 %v273
        %v1207 = vpop.f32.mrb[0].mxu0
        %v1208 = vadd.f32 %v983, %v1207
        %v1209 = vpop.f32.mrb[0].mxu0
        %1210 = vmatprep.mubr.f32.mxu0 %v513
        %1211 = vmatmul.mubr.f32.gmra.mrb[0].mxu0 %v274
        %v1212 = vpop.f32.mrb[0].mxu0
        %v1213 = vadd.f32 %v988, %v1212
        %v1214 = vpop.f32.mrb[0].mxu0
        %1215 = vmatprep.mubr.f32.mxu0 %v442
        %1216 = vmatmul.mubr.f32.gmra.mrb[0].mxu0 %v275
        %v1217 = vpop.f32.mrb[0].mxu0
        %v1218 = vadd.f32 %v993, %v1217
        %v1219 = vpop.f32.mrb[0].mxu0
        %1220 = vmatprep.mubr.f32.mxu0 %v514
        %1221 = vmatmul.mubr.f32.gmra.mrb[0].mxu0 %v276
        %v1222 = vpop.f32.mrb[0].mxu0
        %v1223 = vadd.f32 %v998, %v1222
        %v1224 = vpop.f32.mrb[0].mxu0
        %1225 = vmatprep.mubr.f32.mxu0 %v445
        %1226 = vmatmul.mubr.f32.gmra.mrb[0].mxu0 %v277
        %v1227 = vpop.f32.mrb[0].mxu0
        %v1228 = vadd.f32 %v1003, %v1227
        %v1229 = vpop.f32.mrb[0].mxu0
        %1230 = vmatprep.mubr.f32.mxu0 %v515
        %1231 = vmatmul.mubr.f32.gmra.mrb[0].mxu0 %v278
        %v1232 = vpop.f32.mrb[0].mxu0
        %v1233 = vadd.f32 %v1008, %v1232
        %v1234 = vpop.f32.mrb[0].mxu0
        %1235 = vmatprep.mubr.f32.mxu0 %v448
        %1236 = vmatmul.mubr.f32.gmra.mrb[0].mxu0 %v279
        %v1237 = vpop.f32.mrb[0].mxu0
        %v1238 = vadd.f32 %v1013, %v1237
        %v1239 = vpop.f32.mrb[0].mxu0
        %1240 = vmatprep.mubr.f32.mxu0 %v516
        %1241 = vmatmul.mubr.f32.gmra.mrb[0].mxu0 %v280
        %v1242 = vpop.f32.mrb[0].mxu0
        %v1243 = vadd.f32 %v1018, %v1242
        %v1244 = vpop.f32.mrb[0].mxu0
        %1245 = vmatprep.mubr.f32.mxu0 %v451
        %1246 = vmatmul.mubr.f32.gmra.mrb[0].mxu0 %v281
        %v1247 = vpop.f32.mrb[0].mxu0
        %v1248 = vadd.f32 %v1023, %v1247
        %v1249 = vpop.f32.mrb[0].mxu0
        %1250 = vmatprep.mubr.f32.mxu0 %v517
        %1251 = vmatmul.mubr.f32.gmra.mrb[0].mxu0 %v282
        %v1252 = vpop.f32.mrb[0].mxu0
        %v1253 = vadd.f32 %v1028, %v1252
        %v1254 = vpop.f32.mrb[0].mxu0
        %1255 = vmatprep.mubr.f32.mxu0 %v454
        %1256 = vmatmul.mubr.f32.gmra.mrb[0].mxu0 %v283
        %v1257 = vpop.f32.mrb[0].mxu0
        %v1258 = vadd.f32 %v1033, %v1257
        %v1259 = vpop.f32.mrb[0].mxu0
        %1260 = vmatprep.mubr.f32.mxu0 %v518
        %1261 = vmatmul.mubr.f32.gmra.mrb[0].mxu0 %v284
        %v1262 = vpop.f32.mrb[0].mxu0
        %v1263 = vadd.f32 %v1038, %v1262
        %v1264 = vpop.f32.mrb[0].mxu0
        %1265 = vmatprep.mubr.f32.mxu0 %v457
        %1266 = vmatmul.mubr.f32.gmra.mrb[0].mxu0 %v285
        %v1267 = vpop.f32.mrb[0].mxu0
        %v1268 = vadd.f32 %v1043, %v1267
        %v1269 = vpop.f32.mrb[0].mxu0
        %1270 = vmatprep.mubr.f32.mxu0 %v519
        %1271 = vmatmul.mubr.f32.gmra.mrb[0].mxu0 %v286
        %v1272 = vpop.f32.mrb[0].mxu0
        %v1273 = vadd.f32 %v1048, %v1272
        %v1274 = vpop.f32.mrb[0].mxu0
        %1275 = vmatprep.mubr.f32.mxu0 %v460
        %1276 = vmatmul.mubr.f32.gmra.mrb[0].mxu0 %v287
        %v1277 = vpop.f32.mrb[0].mxu0
        %v1278 = vadd.f32 %v1053, %v1277
        %v1279 = vpop.f32.mrb[0].mxu0
        %1280 = vmatprep.mubr.f32.mxu0 %v520
        %1281 = vmatmul.mubr.f32.gmra.mrb[0].mxu0 %v288
        %v1282 = vpop.f32.mrb[0].mxu0
        %v1283 = vadd.f32 %v1058, %v1282
        %v1284 = vpop.f32.mrb[0].mxu0
        %1285 = vmatprep.mubr.f32.mxu0 %v463
        %1286 = vmatmul.mubr.f32.gmra.mrb[0].mxu0 %v289
        %v1287 = vpop.f32.mrb[0].mxu0
        %v1288 = vadd.f32 %v1063, %v1287
        %v1289 = vpop.f32.mrb[0].mxu0
        %1290 = vmatprep.mubr.f32.mxu0 %v521
        %1291 = vmatmul.mubr.f32.gmra.mrb[0].mxu0 %v290
        %v1292 = vpop.f32.mrb[0].mxu0
        %v1293 = vadd.f32 %v1068, %v1292
        %v1294 = vpop.f32.mrb[0].mxu0
        %1295 = vmatprep.mubr.f32.mxu0 %v466
        %1296 = vmatmul.mubr.f32.gmra.mrb[0].mxu0 %v291
        %v1297 = vpop.f32.mrb[0].mxu0
        %v1298 = vadd.f32 %v1073, %v1297
        %v1299 = vpop.f32.mrb[0].mxu0
        %1300 = vmatprep.mubr.f32.mxu0 %v522
        %1301 = vmatmul.mubr.f32.gmra.mrb[0].mxu0 %v292
        %v1302 = vpop.f32.mrb[0].mxu0
        %v1303 = vadd.f32 %v1078, %v1302
        %v1304 = vpop.f32.mrb[0].mxu0
        %1305 = vmatprep.mubr.f32.mxu0 %v469
        %1306 = vmatmul.mubr.f32.gmra.mrb[0].mxu0 %v293
        %v1307 = vpop.f32.mrb[0].mxu0
        %v1308 = vadd.f32 %v1083, %v1307
        %v1309 = vpop.f32.mrb[0].mxu0
        %1310 = vmatprep.mubr.f32.mxu0 %v523
        %1311 = vmatmul.mubr.f32.gmra.mrb[0].mxu0 %v294
        %v1312 = vpop.f32.mrb[0].mxu0
        %v1313 = vadd.f32 %v1088, %v1312
        %v1314 = vpop.f32.mrb[0].mxu0
        %1315 = vmatprep.mubr.f32.mxu0 %v472
        %1316 = vmatmul.mubr.f32.gmra.mrb[0].mxu0 %v295
        %v1317 = vpop.f32.mrb[0].mxu0
        %v1318 = vadd.f32 %v1093, %v1317
        %v1319 = vpop.f32.mrb[0].mxu0
        %1320 = vmatprep.mubr.f32.mxu0 %v524
        %1321 = vmatmul.mubr.f32.gmra.mrb[0].mxu0 %v296
        %v1322 = vpop.f32.mrb[0].mxu0
        %v1323 = vadd.f32 %v1098, %v1322
        %v1324 = vpop.f32.mrb[0].mxu0
        %1325 = vmatprep.mubr.f32.mxu0 %v475
        %1326 = vmatmul.mubr.f32.gmra.mrb[0].mxu0 %v297
        %v1327 = vpop.f32.mrb[0].mxu0
        %v1328 = vadd.f32 %v1103, %v1327
        %v1329 = vpop.f32.mrb[0].mxu0
        %1330 = vmatprep.mubr.f32.mxu0 %v525
        %1331 = vmatmul.mubr.f32.gmra.mrb[0].mxu0 %v298
        %v1332 = vpop.f32.mrb[0].mxu0
        %v1333 = vadd.f32 %v1108, %v1332
        %v1334 = vpop.f32.mrb[0].mxu0
        %1335 = vmatprep.mubr.f32.mxu0 %v478
        %1336 = vmatmul.mubr.f32.gmra.mrb[0].mxu0 %v299
        %v1337 = vpop.f32.mrb[0].mxu0
        %v1338 = vadd.f32 %v1113, %v1337
        %v1339 = vpop.f32.mrb[0].mxu0
        %1340 = vmatprep.mubr.f32.mxu0 %v526
        %1341 = vmatmul.mubr.f32.gmra.mrb[0].mxu0 %v300
        %v1342 = vpop.f32.mrb[0].mxu0
        %v1343 = vadd.f32 %v1118, %v1342
        %v1344 = vpop.f32.mrb[0].mxu0
        %1345 = vdwg.mxu0
        %1346 = vmatprep.subr.mxu0 0.0
        %1347 = vmatpush1.msra.mxu0 %v623
        %1348 = vmatprep.subr.mxu0 0.0
        %1349 = vmatpush1.msra.mxu0 %v624
        %1350 = vmatprep.subr.mxu0 0.0
        %1351 = vmatpush1.msra.mxu0 %v625
        %1352 = vmatprep.subr.mxu0 0.0
        %1353 = vmatpush1.msra.mxu0 %v626
        %1354 = vmatprep.subr.mxu0 0.0
        %1355 = vmatpush1.msra.mxu0 %v627
        %1356 = vmatprep.subr.mxu0 0.0
        %1357 = vmatpush1.msra.mxu0 %v628
        %1358 = vmatprep.subr.mxu0 0.0
        %1359 = vmatpush1.msra.mxu0 %v629
        %1360 = vmatprep.subr.mxu0 0.0
        %1361 = vmatpush1.msra.mxu0 %v630
        %1362 = vmatprep.subr.mxu0 0.0
        %1363 = vmatpush1.msra.mxu0 %v631
        %1364 = vmatprep.subr.mxu0 0.0
        %1365 = vmatpush1.msra.mxu0 %v632
        %1366 = vmatprep.subr.mxu0 0.0
        %1367 = vmatpush1.msra.mxu0 %v633
        %1368 = vmatprep.subr.mxu0 0.0
        %1369 = vmatpush1.msra.mxu0 %v634
        %1370 = vmatprep.subr.mxu0 0.0
        %1371 = vmatpush1.msra.mxu0 %v635
        %1372 = vmatprep.subr.mxu0 0.0
        %1373 = vmatpush1.msra.mxu0 %v636
        %1374 = vmatprep.subr.mxu0 0.0
        %1375 = vmatpush1.msra.mxu0 %v637
        %1376 = vmatprep.subr.mxu0 0.0
        %1377 = vmatpush1.msra.mxu0 %v638
        %1378 = vmatprep.subr.mxu0 0.0
        %1379 = vmatpush1.msra.mxu0 %v639
        %1380 = vmatprep.subr.mxu0 0.0
        %1381 = vmatpush1.msra.mxu0 %v640
        %1382 = vmatprep.subr.mxu0 0.0
        %1383 = vmatpush1.msra.mxu0 %v641
        %1384 = vmatprep.subr.mxu0 0.0
        %1385 = vmatpush1.msra.mxu0 %v642
        %1386 = vmatprep.subr.mxu0 0.0
        %1387 = vmatpush1.msra.mxu0 %v643
        %1388 = vmatprep.subr.mxu0 0.0
        %1389 = vmatpush1.msra.mxu0 %v644
        %1390 = vmatprep.subr.mxu0 0.0
        %1391 = vmatpush1.msra.mxu0 %v645
        %1392 = vmatprep.subr.mxu0 0.0
        %1393 = vmatpush1.msra.mxu0 %v646
        %1394 = vmatprep.subr.mxu0 0.0
        %1395 = vmatpush1.msra.mxu0 %v647
        %1396 = vmatprep.subr.mxu0 0.0
        %1397 = vmatpush1.msra.mxu0 %v648
        %1398 = vmatprep.subr.mxu0 0.0
        %1399 = vmatpush1.msra.mxu0 %v649
        %1400 = vmatprep.subr.mxu0 0.0
        %1401 = vmatpush1.msra.mxu0 %v650
        %1402 = vmatprep.subr.mxu0 0.0
        %1403 = vmatpush1.msra.mxu0 %v651
        %1404 = vmatprep.subr.mxu0 0.0
        %1405 = vmatpush1.msra.mxu0 %v652
        %1406 = vmatprep.subr.mxu0 0.0
        %1407 = vmatpush1.msra.mxu0 %v653
        %1408 = vmatprep.subr.mxu0 0.0
        %1409 = vmatpush1.msra.mxu0 %v654
        %1410 = vmatprep.mubr.f32.mxu0 %v271
        %1411 = vmatmul.mubr.f32.gmra.mrb[0].mxu0 %v415
        %v1412 = vpop.f32.mrb[0].mxu0
        %v1413 = vadd.f32 %v1188, %v1412
        %v1414 = vpop.f32.mrb[0].mxu0
        %1415 = vmatprep.mubr.f32.mxu0 %v272
        %1416 = vmatmul.mubr.f32.gmra.mrb[0].mxu0 %v339
        %v1417 = vpop.f32.mrb[0].mxu0
        %v1418 = vadd.f32 %v1193, %v1417
        %v1419 = vpop.f32.mrb[0].mxu0
        %1420 = vmatprep.mubr.f32.mxu0 %v273
        %1421 = vmatmul.mubr.f32.gmra.mrb[0].mxu0 %v416
        %v1422 = vpop.f32.mrb[0].mxu0
        %v1423 = vadd.f32 %v1198, %v1422
        %v1424 = vpop.f32.mrb[0].mxu0
        %1425 = vmatprep.mubr.f32.mxu0 %v274
        %1426 = vmatmul.mubr.f32.gmra.mrb[0].mxu0 %v342
        %v1427 = vpop.f32.mrb[0].mxu0
        %v1428 = vadd.f32 %v1203, %v1427
        %v1429 = vpop.f32.mrb[0].mxu0
        %1430 = vmatprep.mubr.f32.mxu0 %v275
        %1431 = vmatmul.mubr.f32.gmra.mrb[0].mxu0 %v417
        %v1432 = vpop.f32.mrb[0].mxu0
        %v1433 = vadd.f32 %v1208, %v1432
        %v1434 = vpop.f32.mrb[0].mxu0
        %1435 = vmatprep.mubr.f32.mxu0 %v276
        %1436 = vmatmul.mubr.f32.gmra.mrb[0].mxu0 %v345
        %v1437 = vpop.f32.mrb[0].mxu0
        %v1438 = vadd.f32 %v1213, %v1437
        %v1439 = vpop.f32.mrb[0].mxu0
        %1440 = vmatprep.mubr.f32.mxu0 %v277
        %1441 = vmatmul.mubr.f32.gmra.mrb[0].mxu0 %v418
        %v1442 = vpop.f32.mrb[0].mxu0
        %v1443 = vadd.f32 %v1218, %v1442
        %v1444 = vpop.f32.mrb[0].mxu0
        %1445 = vmatprep.mubr.f32.mxu0 %v278
        %1446 = vmatmul.mubr.f32.gmra.mrb[0].mxu0 %v348
        %v1447 = vpop.f32.mrb[0].mxu0
        %v1448 = vadd.f32 %v1223, %v1447
        %v1449 = vpop.f32.mrb[0].mxu0
        %1450 = vmatprep.mubr.f32.mxu0 %v279
        %1451 = vmatmul.mubr.f32.gmra.mrb[0].mxu0 %v419
        %v1452 = vpop.f32.mrb[0].mxu0
        %v1453 = vadd.f32 %v1228, %v1452
        %v1454 = vpop.f32.mrb[0].mxu0
        %1455 = vmatprep.mubr.f32.mxu0 %v280
        %1456 = vmatmul.mubr.f32.gmra.mrb[0].mxu0 %v351
        %v1457 = vpop.f32.mrb[0].mxu0
        %v1458 = vadd.f32 %v1233, %v1457
        %v1459 = vpop.f32.mrb[0].mxu0
        %1460 = vmatprep.mubr.f32.mxu0 %v281
        %1461 = vmatmul.mubr.f32.gmra.mrb[0].mxu0 %v420
        %v1462 = vpop.f32.mrb[0].mxu0
        %v1463 = vadd.f32 %v1238, %v1462
        %v1464 = vpop.f32.mrb[0].mxu0
        %1465 = vmatprep.mubr.f32.mxu0 %v282
        %1466 = vmatmul.mubr.f32.gmra.mrb[0].mxu0 %v354
        %v1467 = vpop.f32.mrb[0].mxu0
        %v1468 = vadd.f32 %v1243, %v1467
        %v1469 = vpop.f32.mrb[0].mxu0
        %1470 = vmatprep.mubr.f32.mxu0 %v283
        %1471 = vmatmul.mubr.f32.gmra.mrb[0].mxu0 %v421
        %v1472 = vpop.f32.mrb[0].mxu0
        %v1473 = vadd.f32 %v1248, %v1472
        %v1474 = vpop.f32.mrb[0].mxu0
        %1475 = vmatprep.mubr.f32.mxu0 %v284
        %1476 = vmatmul.mubr.f32.gmra.mrb[0].mxu0 %v357
        %v1477 = vpop.f32.mrb[0].mxu0
        %v1478 = vadd.f32 %v1253, %v1477
        %v1479 = vpop.f32.mrb[0].mxu0
        %1480 = vmatprep.mubr.f32.mxu0 %v285
        %1481 = vmatmul.mubr.f32.gmra.mrb[0].mxu0 %v422
        %v1482 = vpop.f32.mrb[0].mxu0
        %v1483 = vadd.f32 %v1258, %v1482
        %v1484 = vpop.f32.mrb[0].mxu0
        %1485 = vmatprep.mubr.f32.mxu0 %v286
        %1486 = vmatmul.mubr.f32.gmra.mrb[0].mxu0 %v360
        %v1487 = vpop.f32.mrb[0].mxu0
        %v1488 = vadd.f32 %v1263, %v1487
        %v1489 = vpop.f32.mrb[0].mxu0
        %1490 = vmatprep.mubr.f32.mxu0 %v287
        %1491 = vmatmul.mubr.f32.gmra.mrb[0].mxu0 %v423
        %v1492 = vpop.f32.mrb[0].mxu0
        %v1493 = vadd.f32 %v1268, %v1492
        %v1494 = vpop.f32.mrb[0].mxu0
        %1495 = vmatprep.mubr.f32.mxu0 %v288
        %1496 = vmatmul.mubr.f32.gmra.mrb[0].mxu0 %v363
        %v1497 = vpop.f32.mrb[0].mxu0
        %v1498 = vadd.f32 %v1273, %v1497
        %v1499 = vpop.f32.mrb[0].mxu0
        %1500 = vmatprep.mubr.f32.mxu0 %v289
        %1501 = vmatmul.mubr.f32.gmra.mrb[0].mxu0 %v424
        %v1502 = vpop.f32.mrb[0].mxu0
        %v1503 = vadd.f32 %v1278, %v1502
        %v1504 = vpop.f32.mrb[0].mxu0
        %1505 = vmatprep.mubr.f32.mxu0 %v290
        %1506 = vmatmul.mubr.f32.gmra.mrb[0].mxu0 %v366
        %v1507 = vpop.f32.mrb[0].mxu0
        %v1508 = vadd.f32 %v1283, %v1507
        %v1509 = vpop.f32.mrb[0].mxu0
        %1510 = vmatprep.mubr.f32.mxu0 %v291
        %1511 = vmatmul.mubr.f32.gmra.mrb[0].mxu0 %v425
        %v1512 = vpop.f32.mrb[0].mxu0
        %v1513 = vadd.f32 %v1288, %v1512
        %v1514 = vpop.f32.mrb[0].mxu0
        %1515 = vmatprep.mubr.f32.mxu0 %v292
        %1516 = vmatmul.mubr.f32.gmra.mrb[0].mxu0 %v369
        %v1517 = vpop.f32.mrb[0].mxu0
        %v1518 = vadd.f32 %v1293, %v1517
        %v1519 = vpop.f32.mrb[0].mxu0
        %1520 = vmatprep.mubr.f32.mxu0 %v293
        %1521 = vmatmul.mubr.f32.gmra.mrb[0].mxu0 %v426
        %v1522 = vpop.f32.mrb[0].mxu0
        %v1523 = vadd.f32 %v1298, %v1522
        %v1524 = vpop.f32.mrb[0].mxu0
        %1525 = vmatprep.mubr.f32.mxu0 %v294
        %1526 = vmatmul.mubr.f32.gmra.mrb[0].mxu0 %v372
        %v1527 = vpop.f32.mrb[0].mxu0
        %v1528 = vadd.f32 %v1303, %v1527
        %v1529 = vpop.f32.mrb[0].mxu0
        %1530 = vmatprep.mubr.f32.mxu0 %v295
        %1531 = vmatmul.mubr.f32.gmra.mrb[0].mxu0 %v427
        %v1532 = vpop.f32.mrb[0].mxu0
        %v1533 = vadd.f32 %v1308, %v1532
        %v1534 = vpop.f32.mrb[0].mxu0
        %1535 = vmatprep.mubr.f32.mxu0 %v296
        %1536 = vmatmul.mubr.f32.gmra.mrb[0].mxu0 %v375
        %v1537 = vpop.f32.mrb[0].mxu0
        %v1538 = vadd.f32 %v1313, %v1537
        %v1539 = vpop.f32.mrb[0].mxu0
        %1540 = vmatprep.mubr.f32.mxu0 %v297
        %1541 = vmatmul.mubr.f32.gmra.mrb[0].mxu0 %v428
        %v1542 = vpop.f32.mrb[0].mxu0
        %v1543 = vadd.f32 %v1318, %v1542
        %v1544 = vpop.f32.mrb[0].mxu0
        %1545 = vmatprep.mubr.f32.mxu0 %v298
        %1546 = vmatmul.mubr.f32.gmra.mrb[0].mxu0 %v378
        %v1547 = vpop.f32.mrb[0].mxu0
        %v1548 = vadd.f32 %v1323, %v1547
        %v1549 = vpop.f32.mrb[0].mxu0
        %1550 = vmatprep.mubr.f32.mxu0 %v299
        %1551 = vmatmul.mubr.f32.gmra.mrb[0].mxu0 %v429
        %v1552 = vpop.f32.mrb[0].mxu0
        %v1553 = vadd.f32 %v1328, %v1552
        %v1554 = vpop.f32.mrb[0].mxu0
        %1555 = vmatprep.mubr.f32.mxu0 %v300
        %1556 = vmatmul.mubr.f32.gmra.mrb[0].mxu0 %v381
        %v1557 = vpop.f32.mrb[0].mxu0
        %v1558 = vadd.f32 %v1333, %v1557
        %v1559 = vpop.f32.mrb[0].mxu0
        %1560 = vmatprep.mubr.f32.mxu0 0.0
        %1561 = vmatmul.mubr.f32.gmra.mrb[0].mxu0 0.0
        %v1562 = vpop.f32.mrb[0].mxu0
        %v1563 = vadd.f32 %v1338, %v1562
        %v1564 = vpop.f32.mrb[0].mxu0
        %1565 = vmatprep.mubr.f32.mxu0 0.0
        %1566 = vmatmul.mubr.f32.gmra.mrb[0].mxu0 0.0
        %v1567 = vpop.f32.mrb[0].mxu0
        %v1568 = vadd.f32 %v1343, %v1567
        %v1569 = vpop.f32.mrb[0].mxu0
        %1570 = vdwg.mxu0
        %1571 = vmatprep.subr.mxu0 0.0
        %1572 = vmatpush1.msra.mxu0 %v655
        %1573 = vmatprep.subr.mxu0 0.0
        %1574 = vmatpush1.msra.mxu0 %v656
        %1575 = vmatprep.subr.mxu0 0.0
        %1576 = vmatpush1.msra.mxu0 %v657
        %1577 = vmatprep.subr.mxu0 0.0
        %1578 = vmatpush1.msra.mxu0 %v658
        %1579 = vmatprep.subr.mxu0 0.0
        %1580 = vmatpush1.msra.mxu0 %v659
        %1581 = vmatprep.subr.mxu0 0.0
        %1582 = vmatpush1.msra.mxu0 %v660
        %1583 = vmatprep.subr.mxu0 0.0
        %1584 = vmatpush1.msra.mxu0 %v661
        %1585 = vmatprep.subr.mxu0 0.0
        %1586 = vmatpush1.msra.mxu0 %v662
        %1587 = vmatprep.subr.mxu0 0.0
        %1588 = vmatpush1.msra.mxu0 %v663
        %1589 = vmatprep.subr.mxu0 0.0
        %1590 = vmatpush1.msra.mxu0 %v664
        %1591 = vmatprep.subr.mxu0 0.0
        %1592 = vmatpush1.msra.mxu0 %v665
        %1593 = vmatprep.subr.mxu0 0.0
        %1594 = vmatpush1.msra.mxu0 %v666
        %1595 = vmatprep.subr.mxu0 0.0
        %1596 = vmatpush1.msra.mxu0 %v667
        %1597 = vmatprep.subr.mxu0 0.0
        %1598 = vmatpush1.msra.mxu0 %v668
        %1599 = vmatprep.subr.mxu0 0.0
        %1600 = vmatpush1.msra.mxu0 %v669
        %1601 = vmatprep.subr.mxu0 0.0
        %1602 = vmatpush1.msra.mxu0 %v670
        %1603 = vmatprep.subr.mxu0 0.0
        %1604 = vmatpush1.msra.mxu0 0.0
        %1605 = vmatprep.subr.mxu0 0.0
        %1606 = vmatpush1.msra.mxu0 0.0
        %1607 = vmatprep.subr.mxu0 0.0
        %1608 = vmatpush1.msra.mxu0 0.0
        %1609 = vmatprep.subr.mxu0 0.0
        %1610 = vmatpush1.msra.mxu0 0.0
        %1611 = vmatprep.subr.mxu0 0.0
        %1612 = vmatpush1.msra.mxu0 0.0
        %1613 = vmatprep.subr.mxu0 0.0
        %1614 = vmatpush1.msra.mxu0 0.0
        %1615 = vmatprep.subr.mxu0 0.0
        %1616 = vmatpush1.msra.mxu0 0.0
        %1617 = vmatprep.subr.mxu0 0.0
        %1618 = vmatpush1.msra.mxu0 0.0
        %1619 = vmatprep.subr.mxu0 0.0
        %1620 = vmatpush1.msra.mxu0 0.0
        %1621 = vmatprep.subr.mxu0 0.0
        %1622 = vmatpush1.msra.mxu0 0.0
        %1623 = vmatprep.subr.mxu0 0.0
        %1624 = vmatpush1.msra.mxu0 0.0
        %1625 = vmatprep.subr.mxu0 0.0
        %1626 = vmatpush1.msra.mxu0 0.0
        %1627 = vmatprep.subr.mxu0 0.0
        %1628 = vmatpush1.msra.mxu0 0.0
        %1629 = vmatprep.subr.mxu0 0.0
        %1630 = vmatpush1.msra.mxu0 0.0
        %1631 = vmatprep.subr.mxu0 0.0
        %1632 = vmatpush1.msra.mxu0 0.0
        %1633 = vmatprep.subr.mxu0 0.0
        %1634 = vmatpush1.msra.mxu0 0.0
        %1635 = vmatprep.mubr.f32.mxu0 0.0
        %1636 = vmatmul.mubr.f32.gmra.mrb[0].mxu0 %v436
        %v1637 = vpop.f32.mrb[0].mxu0
        %v1638 = vadd.f32 %v1413, %v1637
        %v1639 = vpop.f32.mrb[0].mxu0
        %1640 = vmatprep.mubr.f32.mxu0 0.0
        %1641 = vmatmul.mubr.f32.gmra.mrb[0].mxu0 %v512
        %v1642 = vpop.f32.mrb[0].mxu0
        %v1643 = vadd.f32 %v1418, %v1642
        %v1644 = vpop.f32.mrb[0].mxu0
        %1645 = vmatprep.mubr.f32.mxu0 0.0
        %1646 = vmatmul.mubr.f32.gmra.mrb[0].mxu0 %v439
        %v1647 = vpop.f32.mrb[0].mxu0
        %v1648 = vadd.f32 %v1423, %v1647
        %v1649 = vpop.f32.mrb[0].mxu0
        %1650 = vmatprep.mubr.f32.mxu0 0.0
        %1651 = vmatmul.mubr.f32.gmra.mrb[0].mxu0 %v513
        %v1652 = vpop.f32.mrb[0].mxu0
        %v1653 = vadd.f32 %v1428, %v1652
        %v1654 = vpop.f32.mrb[0].mxu0
        %1655 = vmatprep.mubr.f32.mxu0 0.0
        %1656 = vmatmul.mubr.f32.gmra.mrb[0].mxu0 %v442
        %v1657 = vpop.f32.mrb[0].mxu0
        %v1658 = vadd.f32 %v1433, %v1657
        %v1659 = vpop.f32.mrb[0].mxu0
        %1660 = vmatprep.mubr.f32.mxu0 0.0
        %1661 = vmatmul.mubr.f32.gmra.mrb[0].mxu0 %v514
        %v1662 = vpop.f32.mrb[0].mxu0
        %v1663 = vadd.f32 %v1438, %v1662
        %v1664 = vpop.f32.mrb[0].mxu0
        %1665 = vmatprep.mubr.f32.mxu0 0.0
        %1666 = vmatmul.mubr.f32.gmra.mrb[0].mxu0 %v445
        %v1667 = vpop.f32.mrb[0].mxu0
        %v1668 = vadd.f32 %v1443, %v1667
        %v1669 = vpop.f32.mrb[0].mxu0
        %1670 = vmatprep.mubr.f32.mxu0 0.0
        %1671 = vmatmul.mubr.f32.gmra.mrb[0].mxu0 %v515
        %v1672 = vpop.f32.mrb[0].mxu0
        %v1673 = vadd.f32 %v1448, %v1672
        %v1674 = vpop.f32.mrb[0].mxu0
        %1675 = vmatprep.mubr.f32.mxu0 0.0
        %1676 = vmatmul.mubr.f32.gmra.mrb[0].mxu0 %v448
        %v1677 = vpop.f32.mrb[0].mxu0
        %v1678 = vadd.f32 %v1453, %v1677
        %v1679 = vpop.f32.mrb[0].mxu0
        %1680 = vmatprep.mubr.f32.mxu0 0.0
        %1681 = vmatmul.mubr.f32.gmra.mrb[0].mxu0 %v516
        %v1682 = vpop.f32.mrb[0].mxu0
        %v1683 = vadd.f32 %v1458, %v1682
        %v1684 = vpop.f32.mrb[0].mxu0
        %1685 = vmatprep.mubr.f32.mxu0 0.0
        %1686 = vmatmul.mubr.f32.gmra.mrb[0].mxu0 %v451
        %v1687 = vpop.f32.mrb[0].mxu0
        %v1688 = vadd.f32 %v1463, %v1687
        %v1689 = vpop.f32.mrb[0].mxu0
        %1690 = vmatprep.mubr.f32.mxu0 0.0
        %1691 = vmatmul.mubr.f32.gmra.mrb[0].mxu0 %v517
        %v1692 = vpop.f32.mrb[0].mxu0
        %v1693 = vadd.f32 %v1468, %v1692
        %v1694 = vpop.f32.mrb[0].mxu0
        %1695 = vmatprep.mubr.f32.mxu0 0.0
        %1696 = vmatmul.mubr.f32.gmra.mrb[0].mxu0 %v454
        %v1697 = vpop.f32.mrb[0].mxu0
        %v1698 = vadd.f32 %v1473, %v1697
        %v1699 = vpop.f32.mrb[0].mxu0
        %1700 = vmatprep.mubr.f32.mxu0 0.0
        %1701 = vmatmul.mubr.f32.gmra.mrb[0].mxu0 %v518
        %v1702 = vpop.f32.mrb[0].mxu0
        %v1703 = vadd.f32 %v1478, %v1702
        %v1704 = vpop.f32.mrb[0].mxu0
        %1705 = vmatprep.mubr.f32.mxu0 0.0
        %1706 = vmatmul.mubr.f32.gmra.mrb[0].mxu0 %v457
        %v1707 = vpop.f32.mrb[0].mxu0
        %v1708 = vadd.f32 %v1483, %v1707
        %v1709 = vpop.f32.mrb[0].mxu0
        %1710 = vmatprep.mubr.f32.mxu0 0.0
        %1711 = vmatmul.mubr.f32.gmra.mrb[0].mxu0 %v519
        %v1712 = vpop.f32.mrb[0].mxu0
        %v1713 = vadd.f32 %v1488, %v1712
        %v1714 = vpop.f32.mrb[0].mxu0
        %1715 = vmatprep.mubr.f32.mxu0 0.0
        %1716 = vmatmul.mubr.f32.gmra.mrb[0].mxu0 %v460
        %v1717 = vpop.f32.mrb[0].mxu0
        %v1718 = vadd.f32 %v1493, %v1717
        %v1719 = vpop.f32.mrb[0].mxu0
        %1720 = vmatprep.mubr.f32.mxu0 0.0
        %1721 = vmatmul.mubr.f32.gmra.mrb[0].mxu0 %v520
        %v1722 = vpop.f32.mrb[0].mxu0
        %v1723 = vadd.f32 %v1498, %v1722
        %v1724 = vpop.f32.mrb[0].mxu0
        %1725 = vmatprep.mubr.f32.mxu0 0.0
        %1726 = vmatmul.mubr.f32.gmra.mrb[0].mxu0 %v463
        %v1727 = vpop.f32.mrb[0].mxu0
        %v1728 = vadd.f32 %v1503, %v1727
        %v1729 = vpop.f32.mrb[0].mxu0
        %1730 = vmatprep.mubr.f32.mxu0 0.0
        %1731 = vmatmul.mubr.f32.gmra.mrb[0].mxu0 %v521
        %v1732 = vpop.f32.mrb[0].mxu0
        %v1733 = vadd.f32 %v1508, %v1732
        %v1734 = vpop.f32.mrb[0].mxu0
        %1735 = vmatprep.mubr.f32.mxu0 0.0
        %1736 = vmatmul.mubr.f32.gmra.mrb[0].mxu0 %v466
        %v1737 = vpop.f32.mrb[0].mxu0
        %v1738 = vadd.f32 %v1513, %v1737
        %v1739 = vpop.f32.mrb[0].mxu0
        %1740 = vmatprep.mubr.f32.mxu0 0.0
        %1741 = vmatmul.mubr.f32.gmra.mrb[0].mxu0 %v522
        %v1742 = vpop.f32.mrb[0].mxu0
        %v1743 = vadd.f32 %v1518, %v1742
        %v1744 = vpop.f32.mrb[0].mxu0
        %1745 = vmatprep.mubr.f32.mxu0 0.0
        %1746 = vmatmul.mubr.f32.gmra.mrb[0].mxu0 %v469
        %v1747 = vpop.f32.mrb[0].mxu0
        %v1748 = vadd.f32 %v1523, %v1747
        %v1749 = vpop.f32.mrb[0].mxu0
        %1750 = vmatprep.mubr.f32.mxu0 0.0
        %1751 = vmatmul.mubr.f32.gmra.mrb[0].mxu0 %v523
        %v1752 = vpop.f32.mrb[0].mxu0
        %v1753 = vadd.f32 %v1528, %v1752
        %v1754 = vpop.f32.mrb[0].mxu0
        %1755 = vmatprep.mubr.f32.mxu0 0.0
        %1756 = vmatmul.mubr.f32.gmra.mrb[0].mxu0 %v472
        %v1757 = vpop.f32.mrb[0].mxu0
        %v1758 = vadd.f32 %v1533, %v1757
        %v1759 = vpop.f32.mrb[0].mxu0
        %1760 = vmatprep.mubr.f32.mxu0 0.0
        %1761 = vmatmul.mubr.f32.gmra.mrb[0].mxu0 %v524
        %v1762 = vpop.f32.mrb[0].mxu0
        %v1763 = vadd.f32 %v1538, %v1762
        %v1764 = vpop.f32.mrb[0].mxu0
        %1765 = vmatprep.mubr.f32.mxu0 0.0
        %1766 = vmatmul.mubr.f32.gmra.mrb[0].mxu0 %v475
        %v1767 = vpop.f32.mrb[0].mxu0
        %v1768 = vadd.f32 %v1543, %v1767
        %v1769 = vpop.f32.mrb[0].mxu0
        %1770 = vmatprep.mubr.f32.mxu0 0.0
        %1771 = vmatmul.mubr.f32.gmra.mrb[0].mxu0 %v525
        %v1772 = vpop.f32.mrb[0].mxu0
        %v1773 = vadd.f32 %v1548, %v1772
        %v1774 = vpop.f32.mrb[0].mxu0
        %1775 = vmatprep.mubr.f32.mxu0 0.0
        %1776 = vmatmul.mubr.f32.gmra.mrb[0].mxu0 %v478
        %v1777 = vpop.f32.mrb[0].mxu0
        %v1778 = vadd.f32 %v1553, %v1777
        %v1779 = vpop.f32.mrb[0].mxu0
        %1780 = vmatprep.mubr.f32.mxu0 0.0
        %1781 = vmatmul.mubr.f32.gmra.mrb[0].mxu0 %v526
        %v1782 = vpop.f32.mrb[0].mxu0
        %v1783 = vadd.f32 %v1558, %v1782
        %v1784 = vpop.f32.mrb[0].mxu0
        %1785 = vmatprep.mubr.f32.mxu0 0.0
        %1786 = vmatmul.mubr.f32.gmra.mrb[0].mxu0 0.0
        %v1787 = vpop.f32.mrb[0].mxu0
        %v1788 = vadd.f32 %v1563, %v1787
        %v1789 = vpop.f32.mrb[0].mxu0
        %1790 = vmatprep.mubr.f32.mxu0 0.0
        %1791 = vmatmul.mubr.f32.gmra.mrb[0].mxu0 0.0
        %v1792 = vpop.f32.mrb[0].mxu0
        %v1793 = vadd.f32 %v1568, %v1792
        %v1794 = vpop.f32.mrb[0].mxu0
        %1795 = vdwg.mxu0
        %v1796 = vadd.f32 %v1638, %v1643
        %v1797 = vadd.f32 %v1796, %v1648
        %v1798 = vadd.f32 %v1797, %v1653
        %v1799 = vadd.f32 %v1798, %v1658
        %v1800 = vadd.f32 %v1799, %v1663
        %v1801 = vadd.f32 %v1800, %v1668
        %v1802 = vadd.f32 %v1801, %v1673
        %v1803 = vadd.f32 %v1802, %v1678
        %v1804 = vadd.f32 %v1803, %v1683
        %v1805 = vadd.f32 %v1804, %v1688
        %v1806 = vadd.f32 %v1805, %v1693
        %v1807 = vadd.f32 %v1806, %v1698
        %v1808 = vadd.f32 %v1807, %v1703
        %v1809 = vadd.f32 %v1808, %v1708
        %v1810 = vadd.f32 %v1809, %v1713
        %v1811 = vadd.f32 %v1810, %v1718
        %v1812 = vadd.f32 %v1811, %v1723
        %v1813 = vadd.f32 %v1812, %v1728
        %v1814 = vadd.f32 %v1813, %v1733
        %v1815 = vadd.f32 %v1814, %v1738
        %v1816 = vadd.f32 %v1815, %v1743
        %v1817 = vadd.f32 %v1816, %v1748
        %v1818 = vadd.f32 %v1817, %v1753
        %v1819 = vadd.f32 %v1818, %v1758
        %v1820 = vadd.f32 %v1819, %v1763
        %v1821 = vadd.f32 %v1820, %v1768
        %v1822 = vadd.f32 %v1821, %v1773
        %v1823 = vadd.f32 %v1822, %v1778
        %v1824 = vadd.f32 %v1823, %v1783
        %v1825 = vadd.f32 %v1824, %v1788
        %v1826 = vadd.f32 %v1825, %v1793
        %v1827 = vrot.slane %v1826, 4
        %v1828 = vadd.f32 %v1826, %v1827
        %v1829 = vrot.slane %v1828, 2
        %v1830 = vadd.f32 %v1828, %v1829
        %v1831 = vrot.slane %v1830, 1
        %v1832 = vadd.f32 %v1830, %v1831
        %v1833 = vmul.f32 %v1832, 0.00390625
        %v1834 = vsub.f32 %v1638, %v1833
        %v1835 = vsub.f32 %v1643, %v1833
        %v1836 = vsub.f32 %v1648, %v1833
        %v1837 = vsub.f32 %v1653, %v1833
        %v1838 = vsub.f32 %v1658, %v1833
        %v1839 = vsub.f32 %v1663, %v1833
        %v1840 = vsub.f32 %v1668, %v1833
        %v1841 = vsub.f32 %v1673, %v1833
        %v1842 = vsub.f32 %v1678, %v1833
        %v1843 = vsub.f32 %v1683, %v1833
        %v1844 = vsub.f32 %v1688, %v1833
        %v1845 = vsub.f32 %v1693, %v1833
        %v1846 = vsub.f32 %v1698, %v1833
        %v1847 = vsub.f32 %v1703, %v1833
        %v1848 = vsub.f32 %v1708, %v1833
        %v1849 = vsub.f32 %v1713, %v1833
        %v1850 = vsub.f32 %v1718, %v1833
        %v1851 = vsub.f32 %v1723, %v1833
        %v1852 = vsub.f32 %v1728, %v1833
        %v1853 = vsub.f32 %v1733, %v1833
        %v1854 = vsub.f32 %v1738, %v1833
        %v1855 = vsub.f32 %v1743, %v1833
        %v1856 = vsub.f32 %v1748, %v1833
        %v1857 = vsub.f32 %v1753, %v1833
        %v1858 = vsub.f32 %v1758, %v1833
        %v1859 = vsub.f32 %v1763, %v1833
        %v1860 = vsub.f32 %v1768, %v1833
        %v1861 = vsub.f32 %v1773, %v1833
        %v1862 = vsub.f32 %v1778, %v1833
        %v1863 = vsub.f32 %v1783, %v1833
        %v1864 = vsub.f32 %v1788, %v1833
        %v1865 = vsub.f32 %v1793, %v1833
        %1866 = vst [vmem:[%s268] sm:$0x1] %v1832
        %v1867 = vmul.f32 %v1834, %v1834
        %v1868 = vmul.f32 %v1835, %v1835
        %v1869 = vmul.f32 %v1836, %v1836
        %v1870 = vmul.f32 %v1837, %v1837
        %v1871 = vmul.f32 %v1838, %v1838
        %v1872 = vmul.f32 %v1839, %v1839
        %v1873 = vmul.f32 %v1840, %v1840
        %v1874 = vmul.f32 %v1841, %v1841
        %v1875 = vmul.f32 %v1842, %v1842
        %v1876 = vmul.f32 %v1843, %v1843
        %v1877 = vmul.f32 %v1844, %v1844
        %v1878 = vmul.f32 %v1845, %v1845
        %v1879 = vmul.f32 %v1846, %v1846
        %v1880 = vmul.f32 %v1847, %v1847
        %v1881 = vmul.f32 %v1848, %v1848
        %v1882 = vmul.f32 %v1849, %v1849
        %v1883 = vmul.f32 %v1850, %v1850
        %v1884 = vmul.f32 %v1851, %v1851
        %v1885 = vmul.f32 %v1852, %v1852
        %v1886 = vmul.f32 %v1853, %v1853
        %v1887 = vmul.f32 %v1854, %v1854
        %v1888 = vmul.f32 %v1855, %v1855
        %v1889 = vmul.f32 %v1856, %v1856
        %v1890 = vmul.f32 %v1857, %v1857
        %v1891 = vmul.f32 %v1858, %v1858
        %v1892 = vmul.f32 %v1859, %v1859
        %v1893 = vmul.f32 %v1860, %v1860
        %v1894 = vmul.f32 %v1861, %v1861
        %v1895 = vmul.f32 %v1862, %v1862
        %v1896 = vmul.f32 %v1863, %v1863
        %v1897 = vmul.f32 %v1864, %v1864
        %v1898 = vmul.f32 %v1865, %v1865
        %v1899 = vadd.f32 %v1867, %v1868
        %v1900 = vadd.f32 %v1899, %v1869
        %v1901 = vadd.f32 %v1900, %v1870
        %v1902 = vadd.f32 %v1901, %v1871
        %v1903 = vadd.f32 %v1902, %v1872
        %v1904 = vadd.f32 %v1903, %v1873
        %v1905 = vadd.f32 %v1904, %v1874
        %v1906 = vadd.f32 %v1905, %v1875
        %v1907 = vadd.f32 %v1906, %v1876
        %v1908 = vadd.f32 %v1907, %v1877
        %v1909 = vadd.f32 %v1908, %v1878
        %v1910 = vadd.f32 %v1909, %v1879
        %v1911 = vadd.f32 %v1910, %v1880
        %v1912 = vadd.f32 %v1911, %v1881
        %v1913 = vadd.f32 %v1912, %v1882
        %v1914 = vadd.f32 %v1913, %v1883
        %v1915 = vadd.f32 %v1914, %v1884
        %v1916 = vadd.f32 %v1915, %v1885
        %v1917 = vadd.f32 %v1916, %v1886
        %v1918 = vadd.f32 %v1917, %v1887
        %v1919 = vadd.f32 %v1918, %v1888
        %v1920 = vadd.f32 %v1919, %v1889
        %v1921 = vadd.f32 %v1920, %v1890
        %v1922 = vadd.f32 %v1921, %v1891
        %v1923 = vadd.f32 %v1922, %v1892
        %v1924 = vadd.f32 %v1923, %v1893
        %v1925 = vadd.f32 %v1924, %v1894
        %v1926 = vadd.f32 %v1925, %v1895
        %v1927 = vadd.f32 %v1926, %v1896
        %v1928 = vadd.f32 %v1927, %v1897
        %v1929 = vadd.f32 %v1928, %v1898
        %v1930 = vrot.slane %v1929, 4
        %v1931 = vadd.f32 %v1929, %v1930
        %v1932 = vrot.slane %v1931, 2
        %v1933 = vadd.f32 %v1931, %v1932
        %v1934 = vrot.slane %v1933, 1
        %v1935 = vadd.f32 %v1933, %v1934
        %1936 = vst [vmem:[%s268 + $0x1] sm:$0x1] %v1935
        %1937 = vst [vmem:[%s261] sm:$0xff] %v1638
        %1938 = vst [vmem:[%s261 + $0x8] sm:$0xff] %v1643
        %1939 = vst [vmem:[%s261 + $0x10] sm:$0xff] %v1648
        %1940 = vst [vmem:[%s261 + $0x18] sm:$0xff] %v1653
        %1941 = vst [vmem:[%s261 + $0x20] sm:$0xff] %v1658
        %1942 = vst [vmem:[%s261 + $0x28] sm:$0xff] %v1663
        %1943 = vst [vmem:[%s261 + $0x30] sm:$0xff] %v1668
        %1944 = vst [vmem:[%s261 + $0x38] sm:$0xff] %v1673
        %1945 = vst [vmem:[%s261 + $0x40] sm:$0xff] %v1678
        %1946 = vst [vmem:[%s261 + $0x48] sm:$0xff] %v1683
        %1947 = vst [vmem:[%s261 + $0x50] sm:$0xff] %v1688
        %1948 = vst [vmem:[%s261 + $0x58] sm:$0xff] %v1693
        %1949 = vst [vmem:[%s261 + $0x60] sm:$0xff] %v1698
        %1950 = vst [vmem:[%s261 + $0x68] sm:$0xff] %v1703
        %1951 = vst [vmem:[%s261 + $0x70] sm:$0xff] %v1708
        %1952 = vst [vmem:[%s261 + $0x78] sm:$0xff] %v1713
        %1953 = vst [vmem:[%s261 + $0x80] sm:$0xff] %v1718
        %1954 = vst [vmem:[%s261 + $0x88] sm:$0xff] %v1723
        %1955 = vst [vmem:[%s261 + $0x90] sm:$0xff] %v1728
        %1956 = vst [vmem:[%s261 + $0x98] sm:$0xff] %v1733
        %1957 = vst [vmem:[%s261 + $0xa0] sm:$0xff] %v1738
        %1958 = vst [vmem:[%s261 + $0xa8] sm:$0xff] %v1743
        %1959 = vst [vmem:[%s261 + $0xb0] sm:$0xff] %v1748
        %1960 = vst [vmem:[%s261 + $0xb8] sm:$0xff] %v1753
        %1961 = vst [vmem:[%s261 + $0xc0] sm:$0xff] %v1758
        %1962 = vst [vmem:[%s261 + $0xc8] sm:$0xff] %v1763
        %1963 = vst [vmem:[%s261 + $0xd0] sm:$0xff] %v1768
        %1964 = vst [vmem:[%s261 + $0xd8] sm:$0xff] %v1773
        %1965 = vst [vmem:[%s261 + $0xe0] sm:$0xff] %v1778
        %1966 = vst [vmem:[%s261 + $0xe8] sm:$0xff] %v1783
        %1967 = vst [vmem:[%s261 + $0xf0] sm:$0xff] %v1788
        %1968 = vst [vmem:[%s261 + $0xf8] sm:$0xff] %v1793
        %s1969 = sand.u32 %s124, 1
        %s1970 = scalar_lea.sflag [#allocation4], %s1969
        %s1971 = sand.u32 %s124, 1
        %s1972 = smul.addr %s1971, 256
        %s1973 = scalar_lea.vmem [#allocation7], %s1972
        %s1974 = sand.u32 %s150, 1
        %s1975 = scalar_lea.sflag [#allocation9], %s1974
        %s1976 = sand.u32 %s150, 1
        %s1977 = smul.addr %s1976, 2
        %s1978 = scalar_lea.vmem [#allocation8], %s1977
        // Predicated region
        $region45: #{tpu_custom_call.1} parent=35 // pred_check
          %p1979 = pneg %p134
        $region46: #{tpu_custom_call.1} parent=35 // pred_check_branch
          %1981 = sbr.rel (%p1979) target = $region48
        $region47: #{tpu_custom_call.1} parent=35 // pred_region
          %s1983 = ssub.s32 4096, 4096
          %1984 = vsyncadd %s1970, %s1983
          %s1985 = smul.addr %s27, 32
          %s1986 = smul.addr %s1985, 128
          %s1987 = scalar_lea.hbm %s4, %s1986
          %s1988 = sshll.u32 %s1973, 4
          %s1989 = int_to_ptr.vmem [resolvable:$true] %s1988
          %1994 = dma.vmem_to_hbm [thread:$0]  %s1989, 4096, %s1987, %s1970, 128, 128, 8
        $region48: #{tpu_custom_call.1} parent=35 // pred_fallthru
          _
        // Predicated region
        $region49: #{tpu_custom_call.1} parent=35 // pred_check
          %p1995 = pneg %p160
        $region50: #{tpu_custom_call.1} parent=35 // pred_check_branch
          %1997 = sbr.rel (%p1995) target = $region52
        $region51: #{tpu_custom_call.1} parent=35 // pred_region
          %s1999 = ssub.s32 32, 32
          %2000 = vsyncadd %s1975, %s1999
          %s2001 = smul.addr %s27, 32
          %s2002 = scalar_lea.hbm %s5, %s2001
          %s2004 = sshll.u32 %s1978, 4
          %s2005 = int_to_ptr.vmem [resolvable:$true] %s2004
          %2007 = dma.vmem_to_hbm [thread:$0]  %s2005, 32, %s2002, %s1975
        $region52: #{tpu_custom_call.1} parent=35 // pred_fallthru
          _
      $region36: #{tpu_custom_call.1} parent=5 // pred_fallthru
        _
      %p2008 = scmp.le.s32.totalorder 2, %s22
      // Predicated region
      $region53: #{tpu_custom_call.1} parent=5 // pred_check
        %p2009 = pneg %p2008
      $region54: #{tpu_custom_call.1} parent=5 // pred_check_branch
        %2011 = sbr.rel (%p2009) target = $region56
      $region55: #{tpu_custom_call.1} parent=5 // pred_region
        %s2012 = ssub.s32 %s22, 2
        // Predicated region
        $region57: #{tpu_custom_call.1} parent=55 // pred_check
          %p2013 = pneg %p140
        $region58: #{tpu_custom_call.1} parent=55 // pred_check_branch
          %2015 = sbr.rel (%p2013) target = $region60
        $region59: #{tpu_custom_call.1} parent=55 // pred_region
          %s2016 = sand.u32 %s125, 1
          %s2017 = scalar_lea.sflag [#allocation4], %s2016
          %s2018 = sand.u32 %s125, 1
          %s2019 = smul.addr %s2018, 256
          %s2020 = scalar_lea.vmem [#allocation7], %s2019
          %2021 = dma.done %s2017, 4096
        $region60: #{tpu_custom_call.1} parent=55 // pred_fallthru
          _
        // Predicated region
        $region61: #{tpu_custom_call.1} parent=55 // pred_check
          %p2022 = pneg %p166
        $region62: #{tpu_custom_call.1} parent=55 // pred_check_branch
          %2024 = sbr.rel (%p2022) target = $region64
        $region63: #{tpu_custom_call.1} parent=55 // pred_region
          %s2025 = sand.u32 %s151, 1
          %s2026 = scalar_lea.sflag [#allocation9], %s2025
          %s2027 = sand.u32 %s151, 1
          %s2028 = smul.addr %s2027, 2
          %s2029 = scalar_lea.vmem [#allocation8], %s2028
          %2030 = dma.done %s2026, 32
        $region64: #{tpu_custom_call.1} parent=55 // pred_fallthru
          _
      $region56: #{tpu_custom_call.1} parent=5 // pred_fallthru
        _
    $region6: #{tpu_custom_call.1} parent=1 // loop_footer
      %s26 = sadd.s32 1, %s22
    $region7: #{tpu_custom_call.1} parent=1 // loop_footer_branch
      %21 = sbr.rel target = $region3
    $region8: #{tpu_custom_call.1} parent=1 // loop_exit
      _
    %2031 = vsyncpa [#allocation3], 1
    %s2032 = scalar_lea.sflag [#allocation3], 1
    %2033 = vsyncpa %s2032, 1
    %2034 = vsyncpa [#allocation6], 1
    %2035 = vsyncpa [#allocation4], 1
    %s2036 = scalar_lea.sflag [#allocation4], 1
    %2037 = vsyncpa %s2036, 1
    %2038 = vsyncpa [#allocation9], 1
    %s2039 = scalar_lea.sflag [#allocation9], 1
    %2040 = vsyncpa %s2039, 1

</llo_original>
